<compile_context>
chip_gen: v5e
topology: v5e:2x2
jax: 0.10.0
libtpu: 0.0.40
codegen_flags: <defaults>
</compile_context>

<pallas_src>
import functools

import jax
import jax.numpy as jnp
import numpy as np
from jax.experimental import pallas as pl
from jax.experimental.pallas import tpu as pltpu

KS = 3  # conv kernel size


def _round_up(n, m):
    return ((n + m - 1) // m) * m


def _conv_block_kernel(x_ref, mask_ref, w1_ref, b1_ref, w2_ref, b2_ref, o_ref, *, W, L):
    """(C_pad, L) -> (C_pad, L): two fused conv3x3 + folded-BN + ReLU stages."""
    masks = mask_ref[...]                                       # (9, L), lane-dense

    def stage(inp, w_ref, b_ref):
        # Build the im2col stack (9*C_pad, L): one lane roll (XLU) + border mask
        # per non-center tap, then a single MXU contraction for the whole stage.
        taps = []
        for kh in range(KS):
            for kw in range(KS):
                off = (kh - 1) * W + (kw - 1)                   # flat-index source offset
                k = kh * KS + kw
                if off == 0:
                    taps.append(inp)                            # center tap: mask is all ones
                else:
                    # shifted[:, p] = inp[:, (p + off) mod L]; wrapped / out-of-image
                    # positions are zeroed by the precomputed tap mask.
                    shifted = pltpu.roll(inp, shift=(-off) % L, axis=1)
                    taps.append(shifted * masks[k:k + 1, :])
        stack = jnp.concatenate(taps, axis=0)                   # (9*C_pad, L)
        acc = jnp.dot(w_ref[...], stack,
                      preferred_element_type=jnp.float32,
                      precision=jax.lax.Precision.HIGHEST)      # (C_pad, L) on the MXU
        return jnp.maximum(acc + b_ref[...], 0.0)               # folded BN/conv bias + ReLU

    h1 = stage(x_ref[...], w1_ref, b1_ref)
    h2 = stage(h1, w2_ref, b2_ref)
    o_ref[...] = h2.astype(o_ref.dtype)                         # unmasked lane-dense store


def _fold_bn_to_2d(w, b, gamma, beta, mean, var, eps, c_pad):
    """Fold inference-mode BN into conv weights/bias; emit lane-dense 2-D layout.

    Returns w_2d (c_pad, 9*c_pad) with column index k*c_pad + ci (tap-major, matching
    the in-kernel stack order) and b_col (c_pad, 1)."""
    c_out, c_in = w.shape[0], w.shape[1]
    s = gamma * jax.lax.rsqrt(var + eps)                         # (C_out,)
    w_eff = w * s[:, None, None, None]                           # (C_out, C_in, 3, 3)
    b_eff = (b - mean) * s + beta                                # (C_out,)
    w_t = jnp.transpose(w_eff, (0, 2, 3, 1))                     # (C_out, kh, kw, C_in)
    w_t = jnp.pad(w_t, ((0, c_pad - c_out), (0, 0), (0, 0), (0, c_pad - c_in)))
    w_2d = w_t.reshape(c_pad, KS * KS * c_pad)
    b_col = jnp.pad(b_eff, (0, c_pad - c_out)).reshape(c_pad, 1)
    return w_2d.astype(jnp.float32), b_col.astype(jnp.float32)


def _make_tap_masks(H, W):
    """(9, H*W) f32 validity masks for 'same' zero padding, one per 3x3 tap."""
    hh, ww = np.meshgrid(np.arange(H), np.arange(W), indexing="ij")
    masks = np.zeros((KS * KS, H * W), np.float32)
    for kh in range(KS):
        for kw in range(KS):
            dh, dw = kh - 1, kw - 1
            valid = ((hh + dh >= 0) & (hh + dh < H) &
                     (ww + dw >= 0) & (ww + dw < W))
            masks[kh * KS + kw] = valid.reshape(-1).astype(np.float32)
    return jnp.asarray(masks)


def _is_multi_tc_chip():
    """True on chips with >1 TensorCore per chip (v7x): split the batch over the grid."""
    try:
        kind = jax.devices()[0].device_kind.lower()
    except Exception:
        return False
    return ("v7" in kind) or ("7x" in kind)


def conv_block_forward(x, params):
    """x: (B, C_in, H, W) float32 NCHW -> (B, C_out, H, W)."""
    (w1, b1, g1, be1, m1, v1, w2, b2, g2, be2, m2, v2, eps) = params
    B, C_in, H, W = x.shape
    C_out = w1.shape[0]
    HW = H * W
    # Pad both channel counts to a common multiple of 8 so every tap slab, the
    # im2col concat and the matmul operands are sublane-aligned.
    C_pad = max(_round_up(C_in, 8), _round_up(C_out, 8))

    w1k, b1c = _fold_bn_to_2d(w1, b1, g1, be1, m1, v1, eps, C_pad)
    w2k, b2c = _fold_bn_to_2d(w2, b2, g2, be2, m2, v2, eps, C_pad)
    masks = _make_tap_masks(H, W)                                # (9, HW)

    x_p = jnp.pad(x.reshape(B, C_in, HW), ((0, 0), (0, C_pad - C_in), (0, 0)))

    if _is_multi_tc_chip() and B > 1:
        # v7x: one image per TensorCore via a parallel batch grid.
        kernel = functools.partial(_conv_block_kernel, W=W, L=HW)
        out = pl.pallas_call(
            kernel,
            out_shape=jax.ShapeDtypeStruct((B, C_pad, HW), x.dtype),
            grid=(B,),
            in_specs=[
                pl.BlockSpec((None, C_pad, HW), lambda b: (b, 0, 0)),          # x (per image)
                pl.BlockSpec((KS * KS, HW), lambda b: (0, 0)),                 # tap masks
                pl.BlockSpec((C_pad, KS * KS * C_pad), lambda b: (0, 0)),      # conv1+BN1 W
                pl.BlockSpec((C_pad, 1), lambda b: (0, 0)),                    # conv1+BN1 b
                pl.BlockSpec((C_pad, KS * KS * C_pad), lambda b: (0, 0)),      # conv2+BN2 W
                pl.BlockSpec((C_pad, 1), lambda b: (0, 0)),                    # conv2+BN2 b
            ],
            out_specs=pl.BlockSpec((None, C_pad, HW), lambda b: (b, 0, 0)),
            compiler_params=pltpu.CompilerParams(
                dimension_semantics=("parallel",)),
        )(x_p, masks, w1k, b1c, w2k, b2c)
        out = out[:, :C_out, :].reshape(B, C_out, H, W)
    else:
        # Single-TC chips (v5e/v6e): fold the batch into the lane axis and run a
        # single grid step; cross-image lanes under the rolls are masked border taps.
        L = B * HW
        x_lanes = jnp.transpose(x_p, (1, 0, 2)).reshape(C_pad, L)              # (C_pad, B*HW)
        masks_l = jnp.tile(masks, (1, B))                                      # (9, B*HW)
        kernel = functools.partial(_conv_block_kernel, W=W, L=L)
        out = pl.pallas_call(
            kernel,
            out_shape=jax.ShapeDtypeStruct((C_pad, L), x.dtype),
            grid=(1,),
            in_specs=[
                pl.BlockSpec((C_pad, L), lambda i: (0, 0)),
                pl.BlockSpec((KS * KS, L), lambda i: (0, 0)),
                pl.BlockSpec((C_pad, KS * KS * C_pad), lambda i: (0, 0)),
                pl.BlockSpec((C_pad, 1), lambda i: (0, 0)),
                pl.BlockSpec((C_pad, KS * KS * C_pad), lambda i: (0, 0)),
                pl.BlockSpec((C_pad, 1), lambda i: (0, 0)),
            ],
            out_specs=pl.BlockSpec((C_pad, L), lambda i: (0, 0)),
        )(x_lanes, masks_l, w1k, b1c, w2k, b2c)
        out = (out.reshape(C_pad, B, HW).transpose(1, 0, 2)[:, :C_out, :]
               .reshape(B, C_out, H, W))
    return out


def ref_forward(x, params):
    """Pure-JAX reference: explicit conv + inference-mode BN + ReLU, twice."""
    (w1, b1, g1, be1, m1, v1, w2, b2, g2, be2, m2, v2, eps) = params

    def block(x, w, b, g, be, m, v):
        y = jax.lax.conv_general_dilated(
            x, w, window_strides=(1, 1), padding=[(1, 1), (1, 1)],
            dimension_numbers=("NCHW", "OIHW", "NCHW"),
            precision=jax.lax.Precision.HIGHEST) + b[None, :, None, None]
        y = ((y - m[None, :, None, None]) * jax.lax.rsqrt(v[None, :, None, None] + eps)
             * g[None, :, None, None] + be[None, :, None, None])
        return jnp.maximum(y, 0.0)

    x = block(x, w1, b1, g1, be1, m1, v1)
    x = block(x, w2, b2, g2, be2, m2, v2)
    return x


def make_params(key, ch_in, ch_out):
    ks = jax.random.split(key, 12)
    w1 = 0.2 * jax.random.normal(ks[0], (ch_out, ch_in, KS, KS), jnp.float32)
    b1 = 0.1 * jax.random.normal(ks[1], (ch_out,), jnp.float32)
    g1 = 1.0 + 0.1 * jax.random.normal(ks[2], (ch_out,), jnp.float32)
    be1 = 0.1 * jax.random.normal(ks[3], (ch_out,), jnp.float32)
    m1 = 0.1 * jax.random.normal(ks[4], (ch_out,), jnp.float32)
    v1 = 0.9 + 0.2 * jax.random.uniform(ks[5], (ch_out,), jnp.float32)
    w2 = 0.2 * jax.random.normal(ks[6], (ch_out, ch_out, KS, KS), jnp.float32)
    b2 = 0.1 * jax.random.normal(ks[7], (ch_out,), jnp.float32)
    g2 = 1.0 + 0.1 * jax.random.normal(ks[8], (ch_out,), jnp.float32)
    be2 = 0.1 * jax.random.normal(ks[9], (ch_out,), jnp.float32)
    m2 = 0.1 * jax.random.normal(ks[10], (ch_out,), jnp.float32)
    v2 = 0.9 + 0.2 * jax.random.uniform(ks[11], (ch_out,), jnp.float32)
    eps = 1e-5
    return (w1, b1, g1, be1, m1, v1, w2, b2, g2, be2, m2, v2, eps)


if __name__ == "__main__":
    B, C_in, C_out, H, W = 2, 4, 8, 16, 16
    key = jax.random.PRNGKey(0)
    kx, kp = jax.random.split(key)
    x = jax.random.normal(kx, (B, C_in, H, W), jnp.float32)
    params = make_params(kp, C_in, C_out)

    out = jax.block_until_ready(conv_block_forward(x, params))
    ref = jax.block_until_ready(ref_forward(x, params))
    np.testing.assert_allclose(np.asarray(out), np.asarray(ref), rtol=1e-3, atol=1e-3)
    print("KERNEL_OK")
</pallas_src>

<mosaic_0001>
module attributes {stable_mosaic.version = 11 : i64} {
  func.func @_conv_block_kernel(%arg0: i32, %arg1: memref<8x512xf32, #tpu.memory_space<vmem>>, %arg2: memref<9x512xf32, #tpu.memory_space<vmem>>, %arg3: memref<8x72xf32, #tpu.memory_space<vmem>>, %arg4: memref<8x1xf32, #tpu.memory_space<vmem>>, %arg5: memref<8x72xf32, #tpu.memory_space<vmem>>, %arg6: memref<8x1xf32, #tpu.memory_space<vmem>>, %arg7: memref<8x512xf32, #tpu.memory_space<vmem>>) attributes {dimension_semantics = [#tpu.dimension_semantics<arbitrary>], iteration_bounds = array<i64: 1>, scalar_prefetch = 0 : i64, scratch_operands = 0 : i64, tpu.core_type = #tpu.core_type<tc>, window_params = [{pipeline_mode = #tpu.pipeline_mode<synchronous>, transform_indices = @transform_0, window_bounds = array<i64: 8, 512>}, {pipeline_mode = #tpu.pipeline_mode<synchronous>, transform_indices = @transform_1, window_bounds = array<i64: 9, 512>}, {pipeline_mode = #tpu.pipeline_mode<synchronous>, transform_indices = @transform_2, window_bounds = array<i64: 8, 72>}, {pipeline_mode = #tpu.pipeline_mode<synchronous>, transform_indices = @transform_3, window_bounds = array<i64: 8, 1>}, {pipeline_mode = #tpu.pipeline_mode<synchronous>, transform_indices = @transform_4, window_bounds = array<i64: 8, 72>}, {pipeline_mode = #tpu.pipeline_mode<synchronous>, transform_indices = @transform_5, window_bounds = array<i64: 8, 1>}, {pipeline_mode = #tpu.pipeline_mode<synchronous>, transform_indices = @transform_6, window_bounds = array<i64: 8, 512>}]} {
    %c0 = arith.constant 0 : index
    %c0_0 = arith.constant 0 : index
    %0 = vector.load %arg2[%c0, %c0_0] : memref<9x512xf32, #tpu.memory_space<vmem>>, vector<9x512xf32>
    %c0_1 = arith.constant 0 : index
    %c0_2 = arith.constant 0 : index
    %1 = vector.load %arg1[%c0_1, %c0_2] : memref<8x512xf32, #tpu.memory_space<vmem>>, vector<8x512xf32>
    %c17_i32 = arith.constant 17 : i32
    %2 = tpu.dynamic_rotate %1 by %c17_i32 dim 1 : vector<8x512xf32>, i32 -> vector<8x512xf32>
    %3 = vector.extract_strided_slice %0 {offsets = [0, 0], sizes = [1, 512], strides = [1, 1]} : vector<9x512xf32> to vector<1x512xf32>
    %4 = vector.broadcast %3 : vector<1x512xf32> to vector<8x512xf32>
    %5 = arith.mulf %2, %4 : vector<8x512xf32>
    %c16_i32 = arith.constant 16 : i32
    %6 = tpu.dynamic_rotate %1 by %c16_i32 dim 1 : vector<8x512xf32>, i32 -> vector<8x512xf32>
    %7 = vector.extract_strided_slice %0 {offsets = [1, 0], sizes = [1, 512], strides = [1, 1]} : vector<9x512xf32> to vector<1x512xf32>
    %8 = vector.broadcast %7 : vector<1x512xf32> to vector<8x512xf32>
    %9 = arith.mulf %6, %8 : vector<8x512xf32>
    %c15_i32 = arith.constant 15 : i32
    %10 = tpu.dynamic_rotate %1 by %c15_i32 dim 1 : vector<8x512xf32>, i32 -> vector<8x512xf32>
    %11 = vector.extract_strided_slice %0 {offsets = [2, 0], sizes = [1, 512], strides = [1, 1]} : vector<9x512xf32> to vector<1x512xf32>
    %12 = vector.broadcast %11 : vector<1x512xf32> to vector<8x512xf32>
    %13 = arith.mulf %10, %12 : vector<8x512xf32>
    %c1_i32 = arith.constant 1 : i32
    %14 = tpu.dynamic_rotate %1 by %c1_i32 dim 1 : vector<8x512xf32>, i32 -> vector<8x512xf32>
    %15 = vector.extract_strided_slice %0 {offsets = [3, 0], sizes = [1, 512], strides = [1, 1]} : vector<9x512xf32> to vector<1x512xf32>
    %16 = vector.broadcast %15 : vector<1x512xf32> to vector<8x512xf32>
    %17 = arith.mulf %14, %16 : vector<8x512xf32>
    %c511_i32 = arith.constant 511 : i32
    %18 = tpu.dynamic_rotate %1 by %c511_i32 dim 1 : vector<8x512xf32>, i32 -> vector<8x512xf32>
    %19 = vector.extract_strided_slice %0 {offsets = [5, 0], sizes = [1, 512], strides = [1, 1]} : vector<9x512xf32> to vector<1x512xf32>
    %20 = vector.broadcast %19 : vector<1x512xf32> to vector<8x512xf32>
    %21 = arith.mulf %18, %20 : vector<8x512xf32>
    %c497_i32 = arith.constant 497 : i32
    %22 = tpu.dynamic_rotate %1 by %c497_i32 dim 1 : vector<8x512xf32>, i32 -> vector<8x512xf32>
    %23 = vector.extract_strided_slice %0 {offsets = [6, 0], sizes = [1, 512], strides = [1, 1]} : vector<9x512xf32> to vector<1x512xf32>
    %24 = vector.broadcast %23 : vector<1x512xf32> to vector<8x512xf32>
    %25 = arith.mulf %22, %24 : vector<8x512xf32>
    %c496_i32 = arith.constant 496 : i32
    %26 = tpu.dynamic_rotate %1 by %c496_i32 dim 1 : vector<8x512xf32>, i32 -> vector<8x512xf32>
    %27 = vector.extract_strided_slice %0 {offsets = [7, 0], sizes = [1, 512], strides = [1, 1]} : vector<9x512xf32> to vector<1x512xf32>
    %28 = vector.broadcast %27 : vector<1x512xf32> to vector<8x512xf32>
    %29 = arith.mulf %26, %28 : vector<8x512xf32>
    %c495_i32 = arith.constant 495 : i32
    %30 = tpu.dynamic_rotate %1 by %c495_i32 dim 1 : vector<8x512xf32>, i32 -> vector<8x512xf32>
    %31 = vector.extract_strided_slice %0 {offsets = [8, 0], sizes = [1, 512], strides = [1, 1]} : vector<9x512xf32> to vector<1x512xf32>
    %32 = vector.broadcast %31 : vector<1x512xf32> to vector<8x512xf32>
    %33 = arith.mulf %30, %32 : vector<8x512xf32>
    %34 = tpu.concatenate %5, %9, %13, %17, %1, %21, %25, %29, %33 in 0 : vector<8x512xf32>, vector<8x512xf32>, vector<8x512xf32>, vector<8x512xf32>, vector<8x512xf32>, vector<8x512xf32>, vector<8x512xf32>, vector<8x512xf32>, vector<8x512xf32> -> vector<72x512xf32>
    %c0_3 = arith.constant 0 : index
    %c0_4 = arith.constant 0 : index
    %35 = vector.load %arg3[%c0_3, %c0_4] : memref<8x72xf32, #tpu.memory_space<vmem>>, vector<8x72xf32>
    %cst = arith.constant dense<0.000000e+00> : vector<8x512xf32>
    %36 = tpu.matmul %35, %34, %cst {dimension_numbers = #tpu.dot_dimension_numbers<[1], [0], [0], [1], [0, 0, 1, 1], [], []>, precision = #tpu.contract_precision<fp32>} : vector<8x72xf32>, vector<72x512xf32>, vector<8x512xf32> -> vector<8x512xf32>
    %c0_5 = arith.constant 0 : index
    %c0_6 = arith.constant 0 : index
    %37 = vector.load %arg4[%c0_5, %c0_6] : memref<8x1xf32, #tpu.memory_space<vmem>>, vector<8x1xf32>
    %38 = vector.broadcast %37 : vector<8x1xf32> to vector<8x512xf32>
    %39 = arith.addf %36, %38 : vector<8x512xf32>
    %cst_7 = arith.constant 0.000000e+00 : f32
    %40 = vector.broadcast %cst_7 : f32 to vector<8x512xf32>
    %41 = arith.maximumf %39, %40 : vector<8x512xf32>
    %c17_i32_8 = arith.constant 17 : i32
    %42 = tpu.dynamic_rotate %41 by %c17_i32_8 dim 1 : vector<8x512xf32>, i32 -> vector<8x512xf32>
    %43 = vector.extract_strided_slice %0 {offsets = [0, 0], sizes = [1, 512], strides = [1, 1]} : vector<9x512xf32> to vector<1x512xf32>
    %44 = vector.broadcast %43 : vector<1x512xf32> to vector<8x512xf32>
    %45 = arith.mulf %42, %44 : vector<8x512xf32>
    %c16_i32_9 = arith.constant 16 : i32
    %46 = tpu.dynamic_rotate %41 by %c16_i32_9 dim 1 : vector<8x512xf32>, i32 -> vector<8x512xf32>
    %47 = vector.extract_strided_slice %0 {offsets = [1, 0], sizes = [1, 512], strides = [1, 1]} : vector<9x512xf32> to vector<1x512xf32>
    %48 = vector.broadcast %47 : vector<1x512xf32> to vector<8x512xf32>
    %49 = arith.mulf %46, %48 : vector<8x512xf32>
    %c15_i32_10 = arith.constant 15 : i32
    %50 = tpu.dynamic_rotate %41 by %c15_i32_10 dim 1 : vector<8x512xf32>, i32 -> vector<8x512xf32>
    %51 = vector.extract_strided_slice %0 {offsets = [2, 0], sizes = [1, 512], strides = [1, 1]} : vector<9x512xf32> to vector<1x512xf32>
    %52 = vector.broadcast %51 : vector<1x512xf32> to vector<8x512xf32>
    %53 = arith.mulf %50, %52 : vector<8x512xf32>
    %c1_i32_11 = arith.constant 1 : i32
    %54 = tpu.dynamic_rotate %41 by %c1_i32_11 dim 1 : vector<8x512xf32>, i32 -> vector<8x512xf32>
    %55 = vector.extract_strided_slice %0 {offsets = [3, 0], sizes = [1, 512], strides = [1, 1]} : vector<9x512xf32> to vector<1x512xf32>
    %56 = vector.broadcast %55 : vector<1x512xf32> to vector<8x512xf32>
    %57 = arith.mulf %54, %56 : vector<8x512xf32>
    %c511_i32_12 = arith.constant 511 : i32
    %58 = tpu.dynamic_rotate %41 by %c511_i32_12 dim 1 : vector<8x512xf32>, i32 -> vector<8x512xf32>
    %59 = vector.extract_strided_slice %0 {offsets = [5, 0], sizes = [1, 512], strides = [1, 1]} : vector<9x512xf32> to vector<1x512xf32>
    %60 = vector.broadcast %59 : vector<1x512xf32> to vector<8x512xf32>
    %61 = arith.mulf %58, %60 : vector<8x512xf32>
    %c497_i32_13 = arith.constant 497 : i32
    %62 = tpu.dynamic_rotate %41 by %c497_i32_13 dim 1 : vector<8x512xf32>, i32 -> vector<8x512xf32>
    %63 = vector.extract_strided_slice %0 {offsets = [6, 0], sizes = [1, 512], strides = [1, 1]} : vector<9x512xf32> to vector<1x512xf32>
    %64 = vector.broadcast %63 : vector<1x512xf32> to vector<8x512xf32>
    %65 = arith.mulf %62, %64 : vector<8x512xf32>
    %c496_i32_14 = arith.constant 496 : i32
    %66 = tpu.dynamic_rotate %41 by %c496_i32_14 dim 1 : vector<8x512xf32>, i32 -> vector<8x512xf32>
    %67 = vector.extract_strided_slice %0 {offsets = [7, 0], sizes = [1, 512], strides = [1, 1]} : vector<9x512xf32> to vector<1x512xf32>
    %68 = vector.broadcast %67 : vector<1x512xf32> to vector<8x512xf32>
    %69 = arith.mulf %66, %68 : vector<8x512xf32>
    %c495_i32_15 = arith.constant 495 : i32
    %70 = tpu.dynamic_rotate %41 by %c495_i32_15 dim 1 : vector<8x512xf32>, i32 -> vector<8x512xf32>
    %71 = vector.extract_strided_slice %0 {offsets = [8, 0], sizes = [1, 512], strides = [1, 1]} : vector<9x512xf32> to vector<1x512xf32>
    %72 = vector.broadcast %71 : vector<1x512xf32> to vector<8x512xf32>
    %73 = arith.mulf %70, %72 : vector<8x512xf32>
    %74 = tpu.concatenate %45, %49, %53, %57, %41, %61, %65, %69, %73 in 0 : vector<8x512xf32>, vector<8x512xf32>, vector<8x512xf32>, vector<8x512xf32>, vector<8x512xf32>, vector<8x512xf32>, vector<8x512xf32>, vector<8x512xf32>, vector<8x512xf32> -> vector<72x512xf32>
    %c0_16 = arith.constant 0 : index
    %c0_17 = arith.constant 0 : index
    %75 = vector.load %arg5[%c0_16, %c0_17] : memref<8x72xf32, #tpu.memory_space<vmem>>, vector<8x72xf32>
    %cst_18 = arith.constant dense<0.000000e+00> : vector<8x512xf32>
    %76 = tpu.matmul %75, %74, %cst_18 {dimension_numbers = #tpu.dot_dimension_numbers<[1], [0], [0], [1], [0, 0, 1, 1], [], []>, precision = #tpu.contract_precision<fp32>} : vector<8x72xf32>, vector<72x512xf32>, vector<8x512xf32> -> vector<8x512xf32>
    %c0_19 = arith.constant 0 : index
    %c0_20 = arith.constant 0 : index
    %77 = vector.load %arg6[%c0_19, %c0_20] : memref<8x1xf32, #tpu.memory_space<vmem>>, vector<8x1xf32>
    %78 = vector.broadcast %77 : vector<8x1xf32> to vector<8x512xf32>
    %79 = arith.addf %76, %78 : vector<8x512xf32>
    %cst_21 = arith.constant 0.000000e+00 : f32
    %80 = vector.broadcast %cst_21 : f32 to vector<8x512xf32>
    %81 = arith.maximumf %79, %80 : vector<8x512xf32>
    %c0_22 = arith.constant 0 : index
    %c0_23 = arith.constant 0 : index
    %82 = vector.load %arg7[%c0_22, %c0_23] : memref<8x512xf32, #tpu.memory_space<vmem>>, vector<8x512xf32>
    tpu.vector_store %arg7[%c0_22, %c0_23], %81 {strides = array<i32>} : memref<8x512xf32, #tpu.memory_space<vmem>>, vector<8x512xf32>,
    return
  }
  func.func @transform_0(%arg0: i32) -> (i32, i32) {
    %c0_i32 = arith.constant 0 : i32
    %c0_i32_0 = arith.constant 0 : i32
    %c0_i32_1 = arith.constant 0 : i32
    return %c0_i32, %c0_i32_0 : i32, i32
  }
  func.func @transform_1(%arg0: i32) -> (i32, i32) {
    %c0_i32 = arith.constant 0 : i32
    %c0_i32_0 = arith.constant 0 : i32
    %c0_i32_1 = arith.constant 0 : i32
    return %c0_i32, %c0_i32_0 : i32, i32
  }
  func.func @transform_2(%arg0: i32) -> (i32, i32) {
    %c0_i32 = arith.constant 0 : i32
    %c0_i32_0 = arith.constant 0 : i32
    %c0_i32_1 = arith.constant 0 : i32
    return %c0_i32, %c0_i32_0 : i32, i32
  }
  func.func @transform_3(%arg0: i32) -> (i32, i32) {
    %c0_i32 = arith.constant 0 : i32
    %c0_i32_0 = arith.constant 0 : i32
    %c0_i32_1 = arith.constant 0 : i32
    return %c0_i32, %c0_i32_0 : i32, i32
  }
  func.func @transform_4(%arg0: i32) -> (i32, i32) {
    %c0_i32 = arith.constant 0 : i32
    %c0_i32_0 = arith.constant 0 : i32
    %c0_i32_1 = arith.constant 0 : i32
    return %c0_i32, %c0_i32_0 : i32, i32
  }
  func.func @transform_5(%arg0: i32) -> (i32, i32) {
    %c0_i32 = arith.constant 0 : i32
    %c0_i32_0 = arith.constant 0 : i32
    %c0_i32_1 = arith.constant 0 : i32
    return %c0_i32, %c0_i32_0 : i32, i32
  }
  func.func @transform_6(%arg0: i32) -> (i32, i32) {
    %c0_i32 = arith.constant 0 : i32
    %c0_i32_0 = arith.constant 0 : i32
    %c0_i32_1 = arith.constant 0 : i32
    return %c0_i32, %c0_i32_0 : i32, i32
  }
}

</mosaic_0001>

<llo_original>
// kernel: tpu_custom_call.1
$region0: #{tpu_custom_call.1}
  #allocation0 [shape = 'u32[]', space=smem, size = 0x4, offset = 0x4, fixed_abs, tag = 'smem constant byte address 0x4 - core index']
  #allocation1 [shape = 'u32[72,128]{1,0:T(1,128)}', space=vmem, size = 0x9000, scoped, tag = 'internal scratch']
  %s0 = inlined_call_operand.hbm [shape: f32[8,512], index: 0, kind: input, shape index: {}]
  %s1 = inlined_call_operand.hbm [shape: f32[9,512], index: 1, kind: input, shape index: {}]
  %s2 = inlined_call_operand.vmem [shape: f32[8,72], index: 2, kind: input, shape index: {}]
  %s3 = inlined_call_operand.vmem [shape: f32[8,1], index: 3, kind: input, shape index: {}]
  %s4 = inlined_call_operand.vmem [shape: f32[8,72], index: 4, kind: input, shape index: {}]
  %s5 = inlined_call_operand.vmem [shape: f32[8,1], index: 5, kind: input, shape index: {}]
  %s6 = inlined_call_operand.hbm [shape: f32[8,512], index: 6, kind: output, shape index: {}]
  %s7 = sld [smem:[#allocation0]]
  $region42: #{tpu_custom_call.1} parent=0
    _
  %s9 = ssub.s32 1, %s7
  %s10 = scalar_select 0, %s9, %s7
  $region1: #{tpu_custom_call.1} parent=0
    #allocation2 [shape = 'u8[16384]{0}', space=vmem, size = 0x4000, scoped, tag = 'input window, operand 0, single buffered']
    #allocation3 [shape = 's32[1]{0}', space=sflag, size = 0x4, scoped, tag = 'scoped memory for tpu_custom_call.1']
    #allocation4 [shape = 's32[1]{0}', space=sflag, size = 0x4, scoped, tag = 'scoped memory for tpu_custom_call.1']
    #allocation5 [shape = 'u8[32768]{0}', space=vmem, size = 0x8000, scoped, tag = 'input window, operand 1, single buffered']
    #allocation6 [shape = 's32[1]{0}', space=sflag, size = 0x4, scoped, tag = 'scoped memory for tpu_custom_call.1']
    #allocation7 [shape = 'u8[16384]{0}', space=vmem, size = 0x4000, scoped, tag = 'output window, operand 0, single buffered']
    %11 = vsyncpa [#allocation3], 0
    %12 = vsyncpa [#allocation6], 0
    %13 = vsyncpa [#allocation4], 0
    // Predicated region
    $region2: #{tpu_custom_call.1} parent=1 // pred_check
      _
    $region3: #{tpu_custom_call.1} parent=1 // pred_check_branch
      %15 = sbr.rel (0) target = $region5
    $region4: #{tpu_custom_call.1} parent=1 // pred_region
      %17 = vsyncadd [#allocation3], 0
      %s19 = sshll.u32 %s0, 4
      %s20 = int_to_ptr.hbm [resolvable:$true] %s19
      %s21 = sshll.u32 [#allocation2], 4
      %s22 = int_to_ptr.vmem [resolvable:$true] %s21
      %24 = dma.hbm_to_vmem [thread:$0]  %s20, 512, %s22, [#allocation3]
    $region5: #{tpu_custom_call.1} parent=1 // pred_fallthru
      _
    // Predicated region
    $region6: #{tpu_custom_call.1} parent=1 // pred_check
      _
    $region7: #{tpu_custom_call.1} parent=1 // pred_check_branch
      %26 = sbr.rel (0) target = $region9
    $region8: #{tpu_custom_call.1} parent=1 // pred_region
      %28 = vsyncadd [#allocation6], 0
      %s29 = sshll.u32 %s1, 4
      %s30 = int_to_ptr.hbm [resolvable:$true] %s29
      %s31 = sshll.u32 [#allocation5], 4
      %s32 = int_to_ptr.vmem [resolvable:$true] %s31
      %37 = dma.hbm_to_vmem [thread:$0]  %s30, 1024, %s32, [#allocation6], 512, 512, 32
    $region9: #{tpu_custom_call.1} parent=1 // pred_fallthru
      _
    // Predicated region
    $region10: #{tpu_custom_call.1} parent=1 // pred_check
      _
    $region11: #{tpu_custom_call.1} parent=1 // pred_check_branch
      %39 = sbr.rel (0) target = $region13
    $region12: #{tpu_custom_call.1} parent=1 // pred_region
      _
    $region13: #{tpu_custom_call.1} parent=1 // pred_fallthru
      _
    // Predicated region
    $region14: #{tpu_custom_call.1} parent=1 // pred_check
      _
    $region15: #{tpu_custom_call.1} parent=1 // pred_check_branch
      %41 = sbr.rel (0) target = $region17
    $region16: #{tpu_custom_call.1} parent=1 // pred_region
      _
    $region17: #{tpu_custom_call.1} parent=1 // pred_fallthru
      _
    // Predicated region
    $region18: #{tpu_custom_call.1} parent=1 // pred_check
      _
    $region19: #{tpu_custom_call.1} parent=1 // pred_check_branch
      %43 = sbr.rel (0) target = $region21
    $region20: #{tpu_custom_call.1} parent=1 // pred_region
      _
    $region21: #{tpu_custom_call.1} parent=1 // pred_fallthru
      _
    // Predicated region
    $region22: #{tpu_custom_call.1} parent=1 // pred_check
      _
    $region23: #{tpu_custom_call.1} parent=1 // pred_check_branch
      %45 = sbr.rel (0) target = $region25
    $region24: #{tpu_custom_call.1} parent=1 // pred_region
      _
    $region25: #{tpu_custom_call.1} parent=1 // pred_fallthru
      _
    // Predicated region
    $region26: #{tpu_custom_call.1} parent=1 // pred_check
      _
    $region27: #{tpu_custom_call.1} parent=1 // pred_check_branch
      %47 = sbr.rel (0) target = $region29
    $region28: #{tpu_custom_call.1} parent=1 // pred_region
      %49 = dma.done [#allocation3], 512
    $region29: #{tpu_custom_call.1} parent=1 // pred_fallthru
      _
    // Predicated region
    $region30: #{tpu_custom_call.1} parent=1 // pred_check
      _
    $region31: #{tpu_custom_call.1} parent=1 // pred_check_branch
      %51 = sbr.rel (0) target = $region33
    $region32: #{tpu_custom_call.1} parent=1 // pred_region
      %53 = dma.done [#allocation6], 1024
    $region33: #{tpu_custom_call.1} parent=1 // pred_fallthru
      _
    %v54 = vld [vmem:[#allocation5] sm:$0xff]
    %v55 = vld [vmem:[#allocation5 + $0x8] sm:$0xff]
    %v56 = vld [vmem:[#allocation5 + $0x10] sm:$0xff]
    %v57 = vld [vmem:[#allocation5 + $0x18] sm:$0xff]
    %v58 = vld [vmem:[#allocation5 + $0x20] sm:$0x1]
    %v59 = vld [vmem:[#allocation5 + $0x28] sm:$0x1]
    %v60 = vld [vmem:[#allocation5 + $0x30] sm:$0x1]
    %v61 = vld [vmem:[#allocation5 + $0x38] sm:$0x1]
    %v62 = vld [vmem:[#allocation2] sm:$0xff]
    %v63 = vld [vmem:[#allocation2 + $0x8] sm:$0xff]
    %v64 = vld [vmem:[#allocation2 + $0x10] sm:$0xff]
    %v65 = vld [vmem:[#allocation2 + $0x18] sm:$0xff]
    %66 = vrot.lane.b32.xlu0 %v62, 17
    %v67 = vpop.permute.xlu0 %66
    %68 = vrot.lane.b32.xlu0 %v63, 17
    %v69 = vpop.permute.xlu0 %68
    %70 = vrot.lane.b32.xlu0 %v64, 17
    %v71 = vpop.permute.xlu0 %70
    %72 = vrot.lane.b32.xlu0 %v65, 17
    %v73 = vpop.permute.xlu0 %72
    %v74 = vlaneseq
    %v75 = vand.u32 %v74, 127
    %vm76 = vcmp.lt.s32.totalorder %v75, 17
    %v77 = vsel %vm76, %v71, %v73
    %v78 = vsel %vm76, %v69, %v71
    %v79 = vsel %vm76, %v67, %v69
    %v80 = vsel %vm76, %v73, %v67
    %v81 = vperm.slane %v54, 0
    %v82 = vperm.slane %v55, 0
    %v83 = vperm.slane %v56, 0
    %v84 = vperm.slane %v57, 0
    %v85 = vmul.f32 %v80, %v81
    %v86 = vmul.f32 %v79, %v82
    %v87 = vmul.f32 %v78, %v83
    %v88 = vmul.f32 %v77, %v84
    %89 = vrot.lane.b32.xlu0 %v62, 16
    %v90 = vpop.permute.xlu0 %89
    %91 = vrot.lane.b32.xlu0 %v63, 16
    %v92 = vpop.permute.xlu0 %91
    %93 = vrot.lane.b32.xlu0 %v64, 16
    %v94 = vpop.permute.xlu0 %93
    %95 = vrot.lane.b32.xlu0 %v65, 16
    %v96 = vpop.permute.xlu0 %95
    %vm97 = vcmp.lt.s32.totalorder %v75, 16
    %v98 = vsel %vm97, %v94, %v96
    %v99 = vsel %vm97, %v92, %v94
    %v100 = vsel %vm97, %v90, %v92
    %v101 = vsel %vm97, %v96, %v90
    %v102 = vperm.slane %v54, 1
    %v103 = vperm.slane %v55, 1
    %v104 = vperm.slane %v56, 1
    %v105 = vperm.slane %v57, 1
    %v106 = vmul.f32 %v101, %v102
    %v107 = vmul.f32 %v100, %v103
    %v108 = vmul.f32 %v99, %v104
    %v109 = vmul.f32 %v98, %v105
    %110 = vrot.lane.b32.xlu0 %v62, 15
    %v111 = vpop.permute.xlu0 %110
    %112 = vrot.lane.b32.xlu0 %v63, 15
    %v113 = vpop.permute.xlu0 %112
    %114 = vrot.lane.b32.xlu0 %v64, 15
    %v115 = vpop.permute.xlu0 %114
    %116 = vrot.lane.b32.xlu0 %v65, 15
    %v117 = vpop.permute.xlu0 %116
    %vm118 = vcmp.lt.s32.totalorder %v75, 15
    %v119 = vsel %vm118, %v115, %v117
    %v120 = vsel %vm118, %v113, %v115
    %v121 = vsel %vm118, %v111, %v113
    %v122 = vsel %vm118, %v117, %v111
    %v123 = vperm.slane %v54, 2
    %v124 = vperm.slane %v55, 2
    %v125 = vperm.slane %v56, 2
    %v126 = vperm.slane %v57, 2
    %v127 = vmul.f32 %v122, %v123
    %v128 = vmul.f32 %v121, %v124
    %v129 = vmul.f32 %v120, %v125
    %v130 = vmul.f32 %v119, %v126
    %131 = vrot.lane.b32.xlu0 %v62, 1
    %v132 = vpop.permute.xlu0 %131
    %133 = vrot.lane.b32.xlu0 %v63, 1
    %v134 = vpop.permute.xlu0 %133
    %135 = vrot.lane.b32.xlu0 %v64, 1
    %v136 = vpop.permute.xlu0 %135
    %137 = vrot.lane.b32.xlu0 %v65, 1
    %v138 = vpop.permute.xlu0 %137
    %vm139 = vcmp.lt.s32.totalorder %v75, 1
    %v140 = vsel %vm139, %v136, %v138
    %v141 = vsel %vm139, %v134, %v136
    %v142 = vsel %vm139, %v132, %v134
    %v143 = vsel %vm139, %v138, %v132
    %v144 = vperm.slane %v54, 3
    %v145 = vperm.slane %v55, 3
    %v146 = vperm.slane %v56, 3
    %v147 = vperm.slane %v57, 3
    %v148 = vmul.f32 %v143, %v144
    %v149 = vmul.f32 %v142, %v145
    %v150 = vmul.f32 %v141, %v146
    %v151 = vmul.f32 %v140, %v147
    %152 = vrot.lane.b32.xlu0 %v62, 127
    %v153 = vpop.permute.xlu0 %152
    %154 = vrot.lane.b32.xlu0 %v63, 127
    %v155 = vpop.permute.xlu0 %154
    %156 = vrot.lane.b32.xlu0 %v64, 127
    %v157 = vpop.permute.xlu0 %156
    %158 = vrot.lane.b32.xlu0 %v65, 127
    %v159 = vpop.permute.xlu0 %158
    %vm160 = vcmp.lt.s32.totalorder %v75, 127
    %v161 = vsel %vm160, %v157, %v159
    %v162 = vsel %vm160, %v155, %v157
    %v163 = vsel %vm160, %v153, %v155
    %v164 = vsel %vm160, %v159, %v153
    %v165 = vperm.slane %v54, 5
    %v166 = vperm.slane %v55, 5
    %v167 = vperm.slane %v56, 5
    %v168 = vperm.slane %v57, 5
    %v169 = vmul.f32 %v163, %v165
    %v170 = vmul.f32 %v162, %v166
    %v171 = vmul.f32 %v161, %v167
    %v172 = vmul.f32 %v164, %v168
    %173 = vrot.lane.b32.xlu0 %v62, 113
    %v174 = vpop.permute.xlu0 %173
    %175 = vrot.lane.b32.xlu0 %v63, 113
    %v176 = vpop.permute.xlu0 %175
    %177 = vrot.lane.b32.xlu0 %v64, 113
    %v178 = vpop.permute.xlu0 %177
    %179 = vrot.lane.b32.xlu0 %v65, 113
    %v180 = vpop.permute.xlu0 %179
    %vm181 = vcmp.lt.s32.totalorder %v75, 113
    %v182 = vsel %vm181, %v178, %v180
    %v183 = vsel %vm181, %v176, %v178
    %v184 = vsel %vm181, %v174, %v176
    %v185 = vsel %vm181, %v180, %v174
    %v186 = vperm.slane %v54, 6
    %v187 = vperm.slane %v55, 6
    %v188 = vperm.slane %v56, 6
    %v189 = vperm.slane %v57, 6
    %v190 = vmul.f32 %v184, %v186
    %v191 = vmul.f32 %v183, %v187
    %v192 = vmul.f32 %v182, %v188
    %v193 = vmul.f32 %v185, %v189
    %194 = vrot.lane.b32.xlu0 %v62, 112
    %v195 = vpop.permute.xlu0 %194
    %196 = vrot.lane.b32.xlu0 %v63, 112
    %v197 = vpop.permute.xlu0 %196
    %198 = vrot.lane.b32.xlu0 %v64, 112
    %v199 = vpop.permute.xlu0 %198
    %200 = vrot.lane.b32.xlu0 %v65, 112
    %v201 = vpop.permute.xlu0 %200
    %vm202 = vcmp.lt.s32.totalorder %v75, 112
    %v203 = vsel %vm202, %v199, %v201
    %v204 = vsel %vm202, %v197, %v199
    %v205 = vsel %vm202, %v195, %v197
    %v206 = vsel %vm202, %v201, %v195
    %v207 = vperm.slane %v54, 7
    %v208 = vperm.slane %v55, 7
    %v209 = vperm.slane %v56, 7
    %v210 = vperm.slane %v57, 7
    %v211 = vmul.f32 %v205, %v207
    %v212 = vmul.f32 %v204, %v208
    %v213 = vmul.f32 %v203, %v209
    %v214 = vmul.f32 %v206, %v210
    %215 = vrot.lane.b32.xlu0 %v62, 111
    %v216 = vpop.permute.xlu0 %215
    %217 = vrot.lane.b32.xlu0 %v63, 111
    %v218 = vpop.permute.xlu0 %217
    %219 = vrot.lane.b32.xlu0 %v64, 111
    %v220 = vpop.permute.xlu0 %219
    %221 = vrot.lane.b32.xlu0 %v65, 111
    %v222 = vpop.permute.xlu0 %221
    %vm223 = vcmp.lt.s32.totalorder %v75, 111
    %v224 = vsel %vm223, %v220, %v222
    %v225 = vsel %vm223, %v218, %v220
    %v226 = vsel %vm223, %v216, %v218
    %v227 = vsel %vm223, %v222, %v216
    %v228 = vperm.slane %v58, 0
    %v229 = vperm.slane %v59, 0
    %v230 = vperm.slane %v60, 0
    %v231 = vperm.slane %v61, 0
    %v232 = vmul.f32 %v226, %v228
    %v233 = vmul.f32 %v225, %v229
    %v234 = vmul.f32 %v224, %v230
    %v235 = vmul.f32 %v227, %v231
    %v236 = vld [vmem:[%s2] sm:$0xff]
    %v237 = vld [vmem:[%s3] sm:$0xff]
    %239 = vset.pattern.permute.xlu0 0
    %240 = vperm.xlu0 %239, %v237
    %v241 = vpop.permute.xlu0 %240
    %vm243 = vcmask 588800
    %v245 = vsel %vm243, %v236, 0
    %247 = vmatpush.msra.mxu0 0.0
    %248 = vmatpush.msra.mxu0 0.0
    %249 = vmatpush.msra.mxu0 0.0
    %250 = vmatpush.msra.mxu0 0.0
    %251 = vmatpush.msra.mxu0 0.0
    %252 = vmatpush.msra.mxu0 0.0
    %253 = vmatpush.msra.mxu0 0.0
    %v254 = vand.u32 %v232, 4294901760
    %255 = vmatpush.msra.mxu0 %v254
    %v256 = vand.u32 %v211, 4294901760
    %257 = vmatpush.msra.mxu0 %v256
    %v258 = vand.u32 %v190, 4294901760
    %259 = vmatpush.msra.mxu0 %v258
    %v260 = vand.u32 %v169, 4294901760
    %261 = vmatpush.msra.mxu0 %v260
    %v262 = vand.u32 %v62, 4294901760
    %263 = vmatpush.msra.mxu0 %v262
    %v264 = vand.u32 %v148, 4294901760
    %265 = vmatpush.msra.mxu0 %v264
    %v266 = vand.u32 %v127, 4294901760
    %267 = vmatpush.msra.mxu0 %v266
    %v268 = vand.u32 %v106, 4294901760
    %269 = vmatpush.msra.mxu0 %v268
    %v270 = vand.u32 %v85, 4294901760
    %271 = vmatpush.msra.mxu0 %v270
    %v272 = vand.u32 %v245, 4294901760
    %v273 = vsub.f32 %v245, %v272
    %v274 = vand.u32 %v273, 4294901760
    %v275 = vsub.f32 %v273, %v274
    %v276 = vand.u32 %v275, 4294901760
    %277 = vmatmul.f32.gmra.mxu0 %v276
    %v278 = vpop.f32.mrf.mxu0
    %v279 = vadd.f32 %v241, %v278
    %280 = vdwg.mxu0
    %281 = vmatpush.msra.mxu0 0.0
    %282 = vmatpush.msra.mxu0 0.0
    %283 = vmatpush.msra.mxu0 0.0
    %284 = vmatpush.msra.mxu0 0.0
    %285 = vmatpush.msra.mxu0 0.0
    %286 = vmatpush.msra.mxu0 0.0
    %287 = vmatpush.msra.mxu0 0.0
    %v288 = vand.u32 %v232, 4294901760
    %v289 = vsub.f32 %v232, %v288
    %v290 = vand.u32 %v289, 4294901760
    %v291 = vsub.f32 %v289, %v290
    %v292 = vand.u32 %v291, 4294901760
    %293 = vmatpush.msra.mxu0 %v292
    %v294 = vand.u32 %v211, 4294901760
    %v295 = vsub.f32 %v211, %v294
    %v296 = vand.u32 %v295, 4294901760
    %v297 = vsub.f32 %v295, %v296
    %v298 = vand.u32 %v297, 4294901760
    %299 = vmatpush.msra.mxu0 %v298
    %v300 = vand.u32 %v190, 4294901760
    %v301 = vsub.f32 %v190, %v300
    %v302 = vand.u32 %v301, 4294901760
    %v303 = vsub.f32 %v301, %v302
    %v304 = vand.u32 %v303, 4294901760
    %305 = vmatpush.msra.mxu0 %v304
    %v306 = vand.u32 %v169, 4294901760
    %v307 = vsub.f32 %v169, %v306
    %v308 = vand.u32 %v307, 4294901760
    %v309 = vsub.f32 %v307, %v308
    %v310 = vand.u32 %v309, 4294901760
    %311 = vmatpush.msra.mxu0 %v310
    %v312 = vand.u32 %v62, 4294901760
    %v313 = vsub.f32 %v62, %v312
    %v314 = vand.u32 %v313, 4294901760
    %v315 = vsub.f32 %v313, %v314
    %v316 = vand.u32 %v315, 4294901760
    %317 = vmatpush.msra.mxu0 %v316
    %v318 = vand.u32 %v148, 4294901760
    %v319 = vsub.f32 %v148, %v318
    %v320 = vand.u32 %v319, 4294901760
    %v321 = vsub.f32 %v319, %v320
    %v322 = vand.u32 %v321, 4294901760
    %323 = vmatpush.msra.mxu0 %v322
    %v324 = vand.u32 %v127, 4294901760
    %v325 = vsub.f32 %v127, %v324
    %v326 = vand.u32 %v325, 4294901760
    %v327 = vsub.f32 %v325, %v326
    %v328 = vand.u32 %v327, 4294901760
    %329 = vmatpush.msra.mxu0 %v328
    %v330 = vand.u32 %v106, 4294901760
    %v331 = vsub.f32 %v106, %v330
    %v332 = vand.u32 %v331, 4294901760
    %v333 = vsub.f32 %v331, %v332
    %v334 = vand.u32 %v333, 4294901760
    %335 = vmatpush.msra.mxu0 %v334
    %v336 = vand.u32 %v85, 4294901760
    %v337 = vsub.f32 %v85, %v336
    %v338 = vand.u32 %v337, 4294901760
    %v339 = vsub.f32 %v337, %v338
    %v340 = vand.u32 %v339, 4294901760
    %341 = vmatpush.msra.mxu0 %v340
    %v342 = vand.u32 %v245, 4294901760
    %343 = vmatmul.f32.gmra.mxu0 %v342
    %v344 = vpop.f32.mrf.mxu0
    %v345 = vadd.f32 %v279, %v344
    %346 = vdwg.mxu0
    %347 = vmatpush.msra.mxu0 0.0
    %348 = vmatpush.msra.mxu0 0.0
    %349 = vmatpush.msra.mxu0 0.0
    %350 = vmatpush.msra.mxu0 0.0
    %351 = vmatpush.msra.mxu0 0.0
    %352 = vmatpush.msra.mxu0 0.0
    %353 = vmatpush.msra.mxu0 0.0
    %v354 = vand.u32 %v232, 4294901760
    %v355 = vsub.f32 %v232, %v354
    %356 = vmatpush.msra.mxu0 %v355
    %v357 = vand.u32 %v211, 4294901760
    %v358 = vsub.f32 %v211, %v357
    %359 = vmatpush.msra.mxu0 %v358
    %v360 = vand.u32 %v190, 4294901760
    %v361 = vsub.f32 %v190, %v360
    %362 = vmatpush.msra.mxu0 %v361
    %v363 = vand.u32 %v169, 4294901760
    %v364 = vsub.f32 %v169, %v363
    %365 = vmatpush.msra.mxu0 %v364
    %v366 = vand.u32 %v62, 4294901760
    %v367 = vsub.f32 %v62, %v366
    %368 = vmatpush.msra.mxu0 %v367
    %v369 = vand.u32 %v148, 4294901760
    %v370 = vsub.f32 %v148, %v369
    %371 = vmatpush.msra.mxu0 %v370
    %v372 = vand.u32 %v127, 4294901760
    %v373 = vsub.f32 %v127, %v372
    %374 = vmatpush.msra.mxu0 %v373
    %v375 = vand.u32 %v106, 4294901760
    %v376 = vsub.f32 %v106, %v375
    %377 = vmatpush.msra.mxu0 %v376
    %v378 = vand.u32 %v85, 4294901760
    %v379 = vsub.f32 %v85, %v378
    %380 = vmatpush.msra.mxu0 %v379
    %v381 = vand.u32 %v245, 4294901760
    %v382 = vsub.f32 %v245, %v381
    %383 = vmatmul.f32.gmra.mxu0 %v382
    %v384 = vpop.f32.mrf.mxu0
    %v385 = vadd.f32 %v345, %v384
    %386 = vdwg.mxu0
    %387 = vmatpush.msra.mxu0 0.0
    %388 = vmatpush.msra.mxu0 0.0
    %389 = vmatpush.msra.mxu0 0.0
    %390 = vmatpush.msra.mxu0 0.0
    %391 = vmatpush.msra.mxu0 0.0
    %392 = vmatpush.msra.mxu0 0.0
    %393 = vmatpush.msra.mxu0 0.0
    %v394 = vand.u32 %v232, 4294901760
    %395 = vmatpush.msra.mxu0 %v394
    %v396 = vand.u32 %v211, 4294901760
    %397 = vmatpush.msra.mxu0 %v396
    %v398 = vand.u32 %v190, 4294901760
    %399 = vmatpush.msra.mxu0 %v398
    %v400 = vand.u32 %v169, 4294901760
    %401 = vmatpush.msra.mxu0 %v400
    %v402 = vand.u32 %v62, 4294901760
    %403 = vmatpush.msra.mxu0 %v402
    %v404 = vand.u32 %v148, 4294901760
    %405 = vmatpush.msra.mxu0 %v404
    %v406 = vand.u32 %v127, 4294901760
    %407 = vmatpush.msra.mxu0 %v406
    %v408 = vand.u32 %v106, 4294901760
    %409 = vmatpush.msra.mxu0 %v408
    %v410 = vand.u32 %v85, 4294901760
    %411 = vmatpush.msra.mxu0 %v410
    %v412 = vand.u32 %v245, 4294901760
    %v413 = vsub.f32 %v245, %v412
    %v414 = vand.u32 %v413, 4294901760
    %415 = vmatmul.f32.gmra.mxu0 %v414
    %v416 = vpop.f32.mrf.mxu0
    %v417 = vadd.f32 %v385, %v416
    %418 = vdwg.mxu0
    %419 = vmatpush.msra.mxu0 0.0
    %420 = vmatpush.msra.mxu0 0.0
    %421 = vmatpush.msra.mxu0 0.0
    %422 = vmatpush.msra.mxu0 0.0
    %423 = vmatpush.msra.mxu0 0.0
    %424 = vmatpush.msra.mxu0 0.0
    %425 = vmatpush.msra.mxu0 0.0
    %v426 = vand.u32 %v232, 4294901760
    %v427 = vsub.f32 %v232, %v426
    %v428 = vand.u32 %v427, 4294901760
    %429 = vmatpush.msra.mxu0 %v428
    %v430 = vand.u32 %v211, 4294901760
    %v431 = vsub.f32 %v211, %v430
    %v432 = vand.u32 %v431, 4294901760
    %433 = vmatpush.msra.mxu0 %v432
    %v434 = vand.u32 %v190, 4294901760
    %v435 = vsub.f32 %v190, %v434
    %v436 = vand.u32 %v435, 4294901760
    %437 = vmatpush.msra.mxu0 %v436
    %v438 = vand.u32 %v169, 4294901760
    %v439 = vsub.f32 %v169, %v438
    %v440 = vand.u32 %v439, 4294901760
    %441 = vmatpush.msra.mxu0 %v440
    %v442 = vand.u32 %v62, 4294901760
    %v443 = vsub.f32 %v62, %v442
    %v444 = vand.u32 %v443, 4294901760
    %445 = vmatpush.msra.mxu0 %v444
    %v446 = vand.u32 %v148, 4294901760
    %v447 = vsub.f32 %v148, %v446
    %v448 = vand.u32 %v447, 4294901760
    %449 = vmatpush.msra.mxu0 %v448
    %v450 = vand.u32 %v127, 4294901760
    %v451 = vsub.f32 %v127, %v450
    %v452 = vand.u32 %v451, 4294901760
    %453 = vmatpush.msra.mxu0 %v452
    %v454 = vand.u32 %v106, 4294901760
    %v455 = vsub.f32 %v106, %v454
    %v456 = vand.u32 %v455, 4294901760
    %457 = vmatpush.msra.mxu0 %v456
    %v458 = vand.u32 %v85, 4294901760
    %v459 = vsub.f32 %v85, %v458
    %v460 = vand.u32 %v459, 4294901760
    %461 = vmatpush.msra.mxu0 %v460
    %v462 = vand.u32 %v245, 4294901760
    %463 = vmatmul.f32.gmra.mxu0 %v462
    %v464 = vpop.f32.mrf.mxu0
    %v465 = vadd.f32 %v417, %v464
    %466 = vdwg.mxu0
    %467 = vmatpush.msra.mxu0 0.0
    %468 = vmatpush.msra.mxu0 0.0
    %469 = vmatpush.msra.mxu0 0.0
    %470 = vmatpush.msra.mxu0 0.0
    %471 = vmatpush.msra.mxu0 0.0
    %472 = vmatpush.msra.mxu0 0.0
    %473 = vmatpush.msra.mxu0 0.0
    %v474 = vand.u32 %v232, 4294901760
    %475 = vmatpush.msra.mxu0 %v474
    %v476 = vand.u32 %v211, 4294901760
    %477 = vmatpush.msra.mxu0 %v476
    %v478 = vand.u32 %v190, 4294901760
    %479 = vmatpush.msra.mxu0 %v478
    %v480 = vand.u32 %v169, 4294901760
    %481 = vmatpush.msra.mxu0 %v480
    %v482 = vand.u32 %v62, 4294901760
    %483 = vmatpush.msra.mxu0 %v482
    %v484 = vand.u32 %v148, 4294901760
    %485 = vmatpush.msra.mxu0 %v484
    %v486 = vand.u32 %v127, 4294901760
    %487 = vmatpush.msra.mxu0 %v486
    %v488 = vand.u32 %v106, 4294901760
    %489 = vmatpush.msra.mxu0 %v488
    %v490 = vand.u32 %v85, 4294901760
    %491 = vmatpush.msra.mxu0 %v490
    %v492 = vand.u32 %v245, 4294901760
    %493 = vmatmul.f32.gmra.mxu0 %v492
    %v494 = vpop.f32.mrf.mxu0
    %v495 = vadd.f32 %v465, %v494
    %496 = vdwg.mxu0
    %497 = vmatpush.msra.mxu0 0.0
    %498 = vmatpush.msra.mxu0 0.0
    %499 = vmatpush.msra.mxu0 0.0
    %500 = vmatpush.msra.mxu0 0.0
    %501 = vmatpush.msra.mxu0 0.0
    %502 = vmatpush.msra.mxu0 0.0
    %503 = vmatpush.msra.mxu0 0.0
    %v504 = vand.u32 %v233, 4294901760
    %505 = vmatpush.msra.mxu0 %v504
    %v506 = vand.u32 %v212, 4294901760
    %507 = vmatpush.msra.mxu0 %v506
    %v508 = vand.u32 %v191, 4294901760
    %509 = vmatpush.msra.mxu0 %v508
    %v510 = vand.u32 %v170, 4294901760
    %511 = vmatpush.msra.mxu0 %v510
    %v512 = vand.u32 %v63, 4294901760
    %513 = vmatpush.msra.mxu0 %v512
    %v514 = vand.u32 %v149, 4294901760
    %515 = vmatpush.msra.mxu0 %v514
    %v516 = vand.u32 %v128, 4294901760
    %517 = vmatpush.msra.mxu0 %v516
    %v518 = vand.u32 %v107, 4294901760
    %519 = vmatpush.msra.mxu0 %v518
    %v520 = vand.u32 %v86, 4294901760
    %521 = vmatpush.msra.mxu0 %v520
    %v522 = vand.u32 %v245, 4294901760
    %v523 = vsub.f32 %v245, %v522
    %v524 = vand.u32 %v523, 4294901760
    %v525 = vsub.f32 %v523, %v524
    %v526 = vand.u32 %v525, 4294901760
    %527 = vmatmul.f32.gmra.mxu0 %v526
    %v528 = vpop.f32.mrf.mxu0
    %v529 = vadd.f32 %v241, %v528
    %530 = vdwg.mxu0
    %531 = vmatpush.msra.mxu0 0.0
    %532 = vmatpush.msra.mxu0 0.0
    %533 = vmatpush.msra.mxu0 0.0
    %534 = vmatpush.msra.mxu0 0.0
    %535 = vmatpush.msra.mxu0 0.0
    %536 = vmatpush.msra.mxu0 0.0
    %537 = vmatpush.msra.mxu0 0.0
    %v538 = vand.u32 %v233, 4294901760
    %v539 = vsub.f32 %v233, %v538
    %v540 = vand.u32 %v539, 4294901760
    %v541 = vsub.f32 %v539, %v540
    %v542 = vand.u32 %v541, 4294901760
    %543 = vmatpush.msra.mxu0 %v542
    %v544 = vand.u32 %v212, 4294901760
    %v545 = vsub.f32 %v212, %v544
    %v546 = vand.u32 %v545, 4294901760
    %v547 = vsub.f32 %v545, %v546
    %v548 = vand.u32 %v547, 4294901760
    %549 = vmatpush.msra.mxu0 %v548
    %v550 = vand.u32 %v191, 4294901760
    %v551 = vsub.f32 %v191, %v550
    %v552 = vand.u32 %v551, 4294901760
    %v553 = vsub.f32 %v551, %v552
    %v554 = vand.u32 %v553, 4294901760
    %555 = vmatpush.msra.mxu0 %v554
    %v556 = vand.u32 %v170, 4294901760
    %v557 = vsub.f32 %v170, %v556
    %v558 = vand.u32 %v557, 4294901760
    %v559 = vsub.f32 %v557, %v558
    %v560 = vand.u32 %v559, 4294901760
    %561 = vmatpush.msra.mxu0 %v560
    %v562 = vand.u32 %v63, 4294901760
    %v563 = vsub.f32 %v63, %v562
    %v564 = vand.u32 %v563, 4294901760
    %v565 = vsub.f32 %v563, %v564
    %v566 = vand.u32 %v565, 4294901760
    %567 = vmatpush.msra.mxu0 %v566
    %v568 = vand.u32 %v149, 4294901760
    %v569 = vsub.f32 %v149, %v568
    %v570 = vand.u32 %v569, 4294901760
    %v571 = vsub.f32 %v569, %v570
    %v572 = vand.u32 %v571, 4294901760
    %573 = vmatpush.msra.mxu0 %v572
    %v574 = vand.u32 %v128, 4294901760
    %v575 = vsub.f32 %v128, %v574
    %v576 = vand.u32 %v575, 4294901760
    %v577 = vsub.f32 %v575, %v576
    %v578 = vand.u32 %v577, 4294901760
    %579 = vmatpush.msra.mxu0 %v578
    %v580 = vand.u32 %v107, 4294901760
    %v581 = vsub.f32 %v107, %v580
    %v582 = vand.u32 %v581, 4294901760
    %v583 = vsub.f32 %v581, %v582
    %v584 = vand.u32 %v583, 4294901760
    %585 = vmatpush.msra.mxu0 %v584
    %v586 = vand.u32 %v86, 4294901760
    %v587 = vsub.f32 %v86, %v586
    %v588 = vand.u32 %v587, 4294901760
    %v589 = vsub.f32 %v587, %v588
    %v590 = vand.u32 %v589, 4294901760
    %591 = vmatpush.msra.mxu0 %v590
    %v592 = vand.u32 %v245, 4294901760
    %593 = vmatmul.f32.gmra.mxu0 %v592
    %v594 = vpop.f32.mrf.mxu0
    %v595 = vadd.f32 %v529, %v594
    %596 = vdwg.mxu0
    %597 = vmatpush.msra.mxu0 0.0
    %598 = vmatpush.msra.mxu0 0.0
    %599 = vmatpush.msra.mxu0 0.0
    %600 = vmatpush.msra.mxu0 0.0
    %601 = vmatpush.msra.mxu0 0.0
    %602 = vmatpush.msra.mxu0 0.0
    %603 = vmatpush.msra.mxu0 0.0
    %v604 = vand.u32 %v233, 4294901760
    %v605 = vsub.f32 %v233, %v604
    %606 = vmatpush.msra.mxu0 %v605
    %v607 = vand.u32 %v212, 4294901760
    %v608 = vsub.f32 %v212, %v607
    %609 = vmatpush.msra.mxu0 %v608
    %v610 = vand.u32 %v191, 4294901760
    %v611 = vsub.f32 %v191, %v610
    %612 = vmatpush.msra.mxu0 %v611
    %v613 = vand.u32 %v170, 4294901760
    %v614 = vsub.f32 %v170, %v613
    %615 = vmatpush.msra.mxu0 %v614
    %v616 = vand.u32 %v63, 4294901760
    %v617 = vsub.f32 %v63, %v616
    %618 = vmatpush.msra.mxu0 %v617
    %v619 = vand.u32 %v149, 4294901760
    %v620 = vsub.f32 %v149, %v619
    %621 = vmatpush.msra.mxu0 %v620
    %v622 = vand.u32 %v128, 4294901760
    %v623 = vsub.f32 %v128, %v622
    %624 = vmatpush.msra.mxu0 %v623
    %v625 = vand.u32 %v107, 4294901760
    %v626 = vsub.f32 %v107, %v625
    %627 = vmatpush.msra.mxu0 %v626
    %v628 = vand.u32 %v86, 4294901760
    %v629 = vsub.f32 %v86, %v628
    %630 = vmatpush.msra.mxu0 %v629
    %v631 = vand.u32 %v245, 4294901760
    %v632 = vsub.f32 %v245, %v631
    %633 = vmatmul.f32.gmra.mxu0 %v632
    %v634 = vpop.f32.mrf.mxu0
    %v635 = vadd.f32 %v595, %v634
    %636 = vdwg.mxu0
    %637 = vmatpush.msra.mxu0 0.0
    %638 = vmatpush.msra.mxu0 0.0
    %639 = vmatpush.msra.mxu0 0.0
    %640 = vmatpush.msra.mxu0 0.0
    %641 = vmatpush.msra.mxu0 0.0
    %642 = vmatpush.msra.mxu0 0.0
    %643 = vmatpush.msra.mxu0 0.0
    %v644 = vand.u32 %v233, 4294901760
    %645 = vmatpush.msra.mxu0 %v644
    %v646 = vand.u32 %v212, 4294901760
    %647 = vmatpush.msra.mxu0 %v646
    %v648 = vand.u32 %v191, 4294901760
    %649 = vmatpush.msra.mxu0 %v648
    %v650 = vand.u32 %v170, 4294901760
    %651 = vmatpush.msra.mxu0 %v650
    %v652 = vand.u32 %v63, 4294901760
    %653 = vmatpush.msra.mxu0 %v652
    %v654 = vand.u32 %v149, 4294901760
    %655 = vmatpush.msra.mxu0 %v654
    %v656 = vand.u32 %v128, 4294901760
    %657 = vmatpush.msra.mxu0 %v656
    %v658 = vand.u32 %v107, 4294901760
    %659 = vmatpush.msra.mxu0 %v658
    %v660 = vand.u32 %v86, 4294901760
    %661 = vmatpush.msra.mxu0 %v660
    %v662 = vand.u32 %v245, 4294901760
    %v663 = vsub.f32 %v245, %v662
    %v664 = vand.u32 %v663, 4294901760
    %665 = vmatmul.f32.gmra.mxu0 %v664
    %v666 = vpop.f32.mrf.mxu0
    %v667 = vadd.f32 %v635, %v666
    %668 = vdwg.mxu0
    %669 = vmatpush.msra.mxu0 0.0
    %670 = vmatpush.msra.mxu0 0.0
    %671 = vmatpush.msra.mxu0 0.0
    %672 = vmatpush.msra.mxu0 0.0
    %673 = vmatpush.msra.mxu0 0.0
    %674 = vmatpush.msra.mxu0 0.0
    %675 = vmatpush.msra.mxu0 0.0
    %v676 = vand.u32 %v233, 4294901760
    %v677 = vsub.f32 %v233, %v676
    %v678 = vand.u32 %v677, 4294901760
    %679 = vmatpush.msra.mxu0 %v678
    %v680 = vand.u32 %v212, 4294901760
    %v681 = vsub.f32 %v212, %v680
    %v682 = vand.u32 %v681, 4294901760
    %683 = vmatpush.msra.mxu0 %v682
    %v684 = vand.u32 %v191, 4294901760
    %v685 = vsub.f32 %v191, %v684
    %v686 = vand.u32 %v685, 4294901760
    %687 = vmatpush.msra.mxu0 %v686
    %v688 = vand.u32 %v170, 4294901760
    %v689 = vsub.f32 %v170, %v688
    %v690 = vand.u32 %v689, 4294901760
    %691 = vmatpush.msra.mxu0 %v690
    %v692 = vand.u32 %v63, 4294901760
    %v693 = vsub.f32 %v63, %v692
    %v694 = vand.u32 %v693, 4294901760
    %695 = vmatpush.msra.mxu0 %v694
    %v696 = vand.u32 %v149, 4294901760
    %v697 = vsub.f32 %v149, %v696
    %v698 = vand.u32 %v697, 4294901760
    %699 = vmatpush.msra.mxu0 %v698
    %v700 = vand.u32 %v128, 4294901760
    %v701 = vsub.f32 %v128, %v700
    %v702 = vand.u32 %v701, 4294901760
    %703 = vmatpush.msra.mxu0 %v702
    %v704 = vand.u32 %v107, 4294901760
    %v705 = vsub.f32 %v107, %v704
    %v706 = vand.u32 %v705, 4294901760
    %707 = vmatpush.msra.mxu0 %v706
    %v708 = vand.u32 %v86, 4294901760
    %v709 = vsub.f32 %v86, %v708
    %v710 = vand.u32 %v709, 4294901760
    %711 = vmatpush.msra.mxu0 %v710
    %v712 = vand.u32 %v245, 4294901760
    %713 = vmatmul.f32.gmra.mxu0 %v712
    %v714 = vpop.f32.mrf.mxu0
    %v715 = vadd.f32 %v667, %v714
    %716 = vdwg.mxu0
    %717 = vmatpush.msra.mxu0 0.0
    %718 = vmatpush.msra.mxu0 0.0
    %719 = vmatpush.msra.mxu0 0.0
    %720 = vmatpush.msra.mxu0 0.0
    %721 = vmatpush.msra.mxu0 0.0
    %722 = vmatpush.msra.mxu0 0.0
    %723 = vmatpush.msra.mxu0 0.0
    %v724 = vand.u32 %v233, 4294901760
    %725 = vmatpush.msra.mxu0 %v724
    %v726 = vand.u32 %v212, 4294901760
    %727 = vmatpush.msra.mxu0 %v726
    %v728 = vand.u32 %v191, 4294901760
    %729 = vmatpush.msra.mxu0 %v728
    %v730 = vand.u32 %v170, 4294901760
    %731 = vmatpush.msra.mxu0 %v730
    %v732 = vand.u32 %v63, 4294901760
    %733 = vmatpush.msra.mxu0 %v732
    %v734 = vand.u32 %v149, 4294901760
    %735 = vmatpush.msra.mxu0 %v734
    %v736 = vand.u32 %v128, 4294901760
    %737 = vmatpush.msra.mxu0 %v736
    %v738 = vand.u32 %v107, 4294901760
    %739 = vmatpush.msra.mxu0 %v738
    %v740 = vand.u32 %v86, 4294901760
    %741 = vmatpush.msra.mxu0 %v740
    %v742 = vand.u32 %v245, 4294901760
    %743 = vmatmul.f32.gmra.mxu0 %v742
    %v744 = vpop.f32.mrf.mxu0
    %v745 = vadd.f32 %v715, %v744
    %746 = vdwg.mxu0
    %747 = vmatpush.msra.mxu0 0.0
    %748 = vmatpush.msra.mxu0 0.0
    %749 = vmatpush.msra.mxu0 0.0
    %750 = vmatpush.msra.mxu0 0.0
    %751 = vmatpush.msra.mxu0 0.0
    %752 = vmatpush.msra.mxu0 0.0
    %753 = vmatpush.msra.mxu0 0.0
    %v754 = vand.u32 %v234, 4294901760
    %755 = vmatpush.msra.mxu0 %v754
    %v756 = vand.u32 %v213, 4294901760
    %757 = vmatpush.msra.mxu0 %v756
    %v758 = vand.u32 %v192, 4294901760
    %759 = vmatpush.msra.mxu0 %v758
    %v760 = vand.u32 %v171, 4294901760
    %761 = vmatpush.msra.mxu0 %v760
    %v762 = vand.u32 %v64, 4294901760
    %763 = vmatpush.msra.mxu0 %v762
    %v764 = vand.u32 %v150, 4294901760
    %765 = vmatpush.msra.mxu0 %v764
    %v766 = vand.u32 %v129, 4294901760
    %767 = vmatpush.msra.mxu0 %v766
    %v768 = vand.u32 %v108, 4294901760
    %769 = vmatpush.msra.mxu0 %v768
    %v770 = vand.u32 %v87, 4294901760
    %771 = vmatpush.msra.mxu0 %v770
    %v772 = vand.u32 %v245, 4294901760
    %v773 = vsub.f32 %v245, %v772
    %v774 = vand.u32 %v773, 4294901760
    %v775 = vsub.f32 %v773, %v774
    %v776 = vand.u32 %v775, 4294901760
    %777 = vmatmul.f32.gmra.mxu0 %v776
    %v778 = vpop.f32.mrf.mxu0
    %v779 = vadd.f32 %v241, %v778
    %780 = vdwg.mxu0
    %781 = vmatpush.msra.mxu0 0.0
    %782 = vmatpush.msra.mxu0 0.0
    %783 = vmatpush.msra.mxu0 0.0
    %784 = vmatpush.msra.mxu0 0.0
    %785 = vmatpush.msra.mxu0 0.0
    %786 = vmatpush.msra.mxu0 0.0
    %787 = vmatpush.msra.mxu0 0.0
    %v788 = vand.u32 %v234, 4294901760
    %v789 = vsub.f32 %v234, %v788
    %v790 = vand.u32 %v789, 4294901760
    %v791 = vsub.f32 %v789, %v790
    %v792 = vand.u32 %v791, 4294901760
    %793 = vmatpush.msra.mxu0 %v792
    %v794 = vand.u32 %v213, 4294901760
    %v795 = vsub.f32 %v213, %v794
    %v796 = vand.u32 %v795, 4294901760
    %v797 = vsub.f32 %v795, %v796
    %v798 = vand.u32 %v797, 4294901760
    %799 = vmatpush.msra.mxu0 %v798
    %v800 = vand.u32 %v192, 4294901760
    %v801 = vsub.f32 %v192, %v800
    %v802 = vand.u32 %v801, 4294901760
    %v803 = vsub.f32 %v801, %v802
    %v804 = vand.u32 %v803, 4294901760
    %805 = vmatpush.msra.mxu0 %v804
    %v806 = vand.u32 %v171, 4294901760
    %v807 = vsub.f32 %v171, %v806
    %v808 = vand.u32 %v807, 4294901760
    %v809 = vsub.f32 %v807, %v808
    %v810 = vand.u32 %v809, 4294901760
    %811 = vmatpush.msra.mxu0 %v810
    %v812 = vand.u32 %v64, 4294901760
    %v813 = vsub.f32 %v64, %v812
    %v814 = vand.u32 %v813, 4294901760
    %v815 = vsub.f32 %v813, %v814
    %v816 = vand.u32 %v815, 4294901760
    %817 = vmatpush.msra.mxu0 %v816
    %v818 = vand.u32 %v150, 4294901760
    %v819 = vsub.f32 %v150, %v818
    %v820 = vand.u32 %v819, 4294901760
    %v821 = vsub.f32 %v819, %v820
    %v822 = vand.u32 %v821, 4294901760
    %823 = vmatpush.msra.mxu0 %v822
    %v824 = vand.u32 %v129, 4294901760
    %v825 = vsub.f32 %v129, %v824
    %v826 = vand.u32 %v825, 4294901760
    %v827 = vsub.f32 %v825, %v826
    %v828 = vand.u32 %v827, 4294901760
    %829 = vmatpush.msra.mxu0 %v828
    %v830 = vand.u32 %v108, 4294901760
    %v831 = vsub.f32 %v108, %v830
    %v832 = vand.u32 %v831, 4294901760
    %v833 = vsub.f32 %v831, %v832
    %v834 = vand.u32 %v833, 4294901760
    %835 = vmatpush.msra.mxu0 %v834
    %v836 = vand.u32 %v87, 4294901760
    %v837 = vsub.f32 %v87, %v836
    %v838 = vand.u32 %v837, 4294901760
    %v839 = vsub.f32 %v837, %v838
    %v840 = vand.u32 %v839, 4294901760
    %841 = vmatpush.msra.mxu0 %v840
    %v842 = vand.u32 %v245, 4294901760
    %843 = vmatmul.f32.gmra.mxu0 %v842
    %v844 = vpop.f32.mrf.mxu0
    %v845 = vadd.f32 %v779, %v844
    %846 = vdwg.mxu0
    %847 = vmatpush.msra.mxu0 0.0
    %848 = vmatpush.msra.mxu0 0.0
    %849 = vmatpush.msra.mxu0 0.0
    %850 = vmatpush.msra.mxu0 0.0
    %851 = vmatpush.msra.mxu0 0.0
    %852 = vmatpush.msra.mxu0 0.0
    %853 = vmatpush.msra.mxu0 0.0
    %v854 = vand.u32 %v234, 4294901760
    %v855 = vsub.f32 %v234, %v854
    %856 = vmatpush.msra.mxu0 %v855
    %v857 = vand.u32 %v213, 4294901760
    %v858 = vsub.f32 %v213, %v857
    %859 = vmatpush.msra.mxu0 %v858
    %v860 = vand.u32 %v192, 4294901760
    %v861 = vsub.f32 %v192, %v860
    %862 = vmatpush.msra.mxu0 %v861
    %v863 = vand.u32 %v171, 4294901760
    %v864 = vsub.f32 %v171, %v863
    %865 = vmatpush.msra.mxu0 %v864
    %v866 = vand.u32 %v64, 4294901760
    %v867 = vsub.f32 %v64, %v866
    %868 = vmatpush.msra.mxu0 %v867
    %v869 = vand.u32 %v150, 4294901760
    %v870 = vsub.f32 %v150, %v869
    %871 = vmatpush.msra.mxu0 %v870
    %v872 = vand.u32 %v129, 4294901760
    %v873 = vsub.f32 %v129, %v872
    %874 = vmatpush.msra.mxu0 %v873
    %v875 = vand.u32 %v108, 4294901760
    %v876 = vsub.f32 %v108, %v875
    %877 = vmatpush.msra.mxu0 %v876
    %v878 = vand.u32 %v87, 4294901760
    %v879 = vsub.f32 %v87, %v878
    %880 = vmatpush.msra.mxu0 %v879
    %v881 = vand.u32 %v245, 4294901760
    %v882 = vsub.f32 %v245, %v881
    %883 = vmatmul.f32.gmra.mxu0 %v882
    %v884 = vpop.f32.mrf.mxu0
    %v885 = vadd.f32 %v845, %v884
    %886 = vdwg.mxu0
    %887 = vmatpush.msra.mxu0 0.0
    %888 = vmatpush.msra.mxu0 0.0
    %889 = vmatpush.msra.mxu0 0.0
    %890 = vmatpush.msra.mxu0 0.0
    %891 = vmatpush.msra.mxu0 0.0
    %892 = vmatpush.msra.mxu0 0.0
    %893 = vmatpush.msra.mxu0 0.0
    %v894 = vand.u32 %v234, 4294901760
    %895 = vmatpush.msra.mxu0 %v894
    %v896 = vand.u32 %v213, 4294901760
    %897 = vmatpush.msra.mxu0 %v896
    %v898 = vand.u32 %v192, 4294901760
    %899 = vmatpush.msra.mxu0 %v898
    %v900 = vand.u32 %v171, 4294901760
    %901 = vmatpush.msra.mxu0 %v900
    %v902 = vand.u32 %v64, 4294901760
    %903 = vmatpush.msra.mxu0 %v902
    %v904 = vand.u32 %v150, 4294901760
    %905 = vmatpush.msra.mxu0 %v904
    %v906 = vand.u32 %v129, 4294901760
    %907 = vmatpush.msra.mxu0 %v906
    %v908 = vand.u32 %v108, 4294901760
    %909 = vmatpush.msra.mxu0 %v908
    %v910 = vand.u32 %v87, 4294901760
    %911 = vmatpush.msra.mxu0 %v910
    %v912 = vand.u32 %v245, 4294901760
    %v913 = vsub.f32 %v245, %v912
    %v914 = vand.u32 %v913, 4294901760
    %915 = vmatmul.f32.gmra.mxu0 %v914
    %v916 = vpop.f32.mrf.mxu0
    %v917 = vadd.f32 %v885, %v916
    %918 = vdwg.mxu0
    %919 = vmatpush.msra.mxu0 0.0
    %920 = vmatpush.msra.mxu0 0.0
    %921 = vmatpush.msra.mxu0 0.0
    %922 = vmatpush.msra.mxu0 0.0
    %923 = vmatpush.msra.mxu0 0.0
    %924 = vmatpush.msra.mxu0 0.0
    %925 = vmatpush.msra.mxu0 0.0
    %v926 = vand.u32 %v234, 4294901760
    %v927 = vsub.f32 %v234, %v926
    %v928 = vand.u32 %v927, 4294901760
    %929 = vmatpush.msra.mxu0 %v928
    %v930 = vand.u32 %v213, 4294901760
    %v931 = vsub.f32 %v213, %v930
    %v932 = vand.u32 %v931, 4294901760
    %933 = vmatpush.msra.mxu0 %v932
    %v934 = vand.u32 %v192, 4294901760
    %v935 = vsub.f32 %v192, %v934
    %v936 = vand.u32 %v935, 4294901760
    %937 = vmatpush.msra.mxu0 %v936
    %v938 = vand.u32 %v171, 4294901760
    %v939 = vsub.f32 %v171, %v938
    %v940 = vand.u32 %v939, 4294901760
    %941 = vmatpush.msra.mxu0 %v940
    %v942 = vand.u32 %v64, 4294901760
    %v943 = vsub.f32 %v64, %v942
    %v944 = vand.u32 %v943, 4294901760
    %945 = vmatpush.msra.mxu0 %v944
    %v946 = vand.u32 %v150, 4294901760
    %v947 = vsub.f32 %v150, %v946
    %v948 = vand.u32 %v947, 4294901760
    %949 = vmatpush.msra.mxu0 %v948
    %v950 = vand.u32 %v129, 4294901760
    %v951 = vsub.f32 %v129, %v950
    %v952 = vand.u32 %v951, 4294901760
    %953 = vmatpush.msra.mxu0 %v952
    %v954 = vand.u32 %v108, 4294901760
    %v955 = vsub.f32 %v108, %v954
    %v956 = vand.u32 %v955, 4294901760
    %957 = vmatpush.msra.mxu0 %v956
    %v958 = vand.u32 %v87, 4294901760
    %v959 = vsub.f32 %v87, %v958
    %v960 = vand.u32 %v959, 4294901760
    %961 = vmatpush.msra.mxu0 %v960
    %v962 = vand.u32 %v245, 4294901760
    %963 = vmatmul.f32.gmra.mxu0 %v962
    %v964 = vpop.f32.mrf.mxu0
    %v965 = vadd.f32 %v917, %v964
    %966 = vdwg.mxu0
    %967 = vmatpush.msra.mxu0 0.0
    %968 = vmatpush.msra.mxu0 0.0
    %969 = vmatpush.msra.mxu0 0.0
    %970 = vmatpush.msra.mxu0 0.0
    %971 = vmatpush.msra.mxu0 0.0
    %972 = vmatpush.msra.mxu0 0.0
    %973 = vmatpush.msra.mxu0 0.0
    %v974 = vand.u32 %v234, 4294901760
    %975 = vmatpush.msra.mxu0 %v974
    %v976 = vand.u32 %v213, 4294901760
    %977 = vmatpush.msra.mxu0 %v976
    %v978 = vand.u32 %v192, 4294901760
    %979 = vmatpush.msra.mxu0 %v978
    %v980 = vand.u32 %v171, 4294901760
    %981 = vmatpush.msra.mxu0 %v980
    %v982 = vand.u32 %v64, 4294901760
    %983 = vmatpush.msra.mxu0 %v982
    %v984 = vand.u32 %v150, 4294901760
    %985 = vmatpush.msra.mxu0 %v984
    %v986 = vand.u32 %v129, 4294901760
    %987 = vmatpush.msra.mxu0 %v986
    %v988 = vand.u32 %v108, 4294901760
    %989 = vmatpush.msra.mxu0 %v988
    %v990 = vand.u32 %v87, 4294901760
    %991 = vmatpush.msra.mxu0 %v990
    %v992 = vand.u32 %v245, 4294901760
    %993 = vmatmul.f32.gmra.mxu0 %v992
    %v994 = vpop.f32.mrf.mxu0
    %v995 = vadd.f32 %v965, %v994
    %996 = vdwg.mxu0
    %997 = vmatpush.msra.mxu0 0.0
    %998 = vmatpush.msra.mxu0 0.0
    %999 = vmatpush.msra.mxu0 0.0
    %1000 = vmatpush.msra.mxu0 0.0
    %1001 = vmatpush.msra.mxu0 0.0
    %1002 = vmatpush.msra.mxu0 0.0
    %1003 = vmatpush.msra.mxu0 0.0
    %v1004 = vand.u32 %v235, 4294901760
    %1005 = vmatpush.msra.mxu0 %v1004
    %v1006 = vand.u32 %v214, 4294901760
    %1007 = vmatpush.msra.mxu0 %v1006
    %v1008 = vand.u32 %v193, 4294901760
    %1009 = vmatpush.msra.mxu0 %v1008
    %v1010 = vand.u32 %v172, 4294901760
    %1011 = vmatpush.msra.mxu0 %v1010
    %v1012 = vand.u32 %v65, 4294901760
    %1013 = vmatpush.msra.mxu0 %v1012
    %v1014 = vand.u32 %v151, 4294901760
    %1015 = vmatpush.msra.mxu0 %v1014
    %v1016 = vand.u32 %v130, 4294901760
    %1017 = vmatpush.msra.mxu0 %v1016
    %v1018 = vand.u32 %v109, 4294901760
    %1019 = vmatpush.msra.mxu0 %v1018
    %v1020 = vand.u32 %v88, 4294901760
    %1021 = vmatpush.msra.mxu0 %v1020
    %v1022 = vand.u32 %v245, 4294901760
    %v1023 = vsub.f32 %v245, %v1022
    %v1024 = vand.u32 %v1023, 4294901760
    %v1025 = vsub.f32 %v1023, %v1024
    %v1026 = vand.u32 %v1025, 4294901760
    %1027 = vmatmul.f32.gmra.mxu0 %v1026
    %v1028 = vpop.f32.mrf.mxu0
    %v1029 = vadd.f32 %v241, %v1028
    %1030 = vdwg.mxu0
    %1031 = vmatpush.msra.mxu0 0.0
    %1032 = vmatpush.msra.mxu0 0.0
    %1033 = vmatpush.msra.mxu0 0.0
    %1034 = vmatpush.msra.mxu0 0.0
    %1035 = vmatpush.msra.mxu0 0.0
    %1036 = vmatpush.msra.mxu0 0.0
    %1037 = vmatpush.msra.mxu0 0.0
    %v1038 = vand.u32 %v235, 4294901760
    %v1039 = vsub.f32 %v235, %v1038
    %v1040 = vand.u32 %v1039, 4294901760
    %v1041 = vsub.f32 %v1039, %v1040
    %v1042 = vand.u32 %v1041, 4294901760
    %1043 = vmatpush.msra.mxu0 %v1042
    %v1044 = vand.u32 %v214, 4294901760
    %v1045 = vsub.f32 %v214, %v1044
    %v1046 = vand.u32 %v1045, 4294901760
    %v1047 = vsub.f32 %v1045, %v1046
    %v1048 = vand.u32 %v1047, 4294901760
    %1049 = vmatpush.msra.mxu0 %v1048
    %v1050 = vand.u32 %v193, 4294901760
    %v1051 = vsub.f32 %v193, %v1050
    %v1052 = vand.u32 %v1051, 4294901760
    %v1053 = vsub.f32 %v1051, %v1052
    %v1054 = vand.u32 %v1053, 4294901760
    %1055 = vmatpush.msra.mxu0 %v1054
    %v1056 = vand.u32 %v172, 4294901760
    %v1057 = vsub.f32 %v172, %v1056
    %v1058 = vand.u32 %v1057, 4294901760
    %v1059 = vsub.f32 %v1057, %v1058
    %v1060 = vand.u32 %v1059, 4294901760
    %1061 = vmatpush.msra.mxu0 %v1060
    %v1062 = vand.u32 %v65, 4294901760
    %v1063 = vsub.f32 %v65, %v1062
    %v1064 = vand.u32 %v1063, 4294901760
    %v1065 = vsub.f32 %v1063, %v1064
    %v1066 = vand.u32 %v1065, 4294901760
    %1067 = vmatpush.msra.mxu0 %v1066
    %v1068 = vand.u32 %v151, 4294901760
    %v1069 = vsub.f32 %v151, %v1068
    %v1070 = vand.u32 %v1069, 4294901760
    %v1071 = vsub.f32 %v1069, %v1070
    %v1072 = vand.u32 %v1071, 4294901760
    %1073 = vmatpush.msra.mxu0 %v1072
    %v1074 = vand.u32 %v130, 4294901760
    %v1075 = vsub.f32 %v130, %v1074
    %v1076 = vand.u32 %v1075, 4294901760
    %v1077 = vsub.f32 %v1075, %v1076
    %v1078 = vand.u32 %v1077, 4294901760
    %1079 = vmatpush.msra.mxu0 %v1078
    %v1080 = vand.u32 %v109, 4294901760
    %v1081 = vsub.f32 %v109, %v1080
    %v1082 = vand.u32 %v1081, 4294901760
    %v1083 = vsub.f32 %v1081, %v1082
    %v1084 = vand.u32 %v1083, 4294901760
    %1085 = vmatpush.msra.mxu0 %v1084
    %v1086 = vand.u32 %v88, 4294901760
    %v1087 = vsub.f32 %v88, %v1086
    %v1088 = vand.u32 %v1087, 4294901760
    %v1089 = vsub.f32 %v1087, %v1088
    %v1090 = vand.u32 %v1089, 4294901760
    %1091 = vmatpush.msra.mxu0 %v1090
    %v1092 = vand.u32 %v245, 4294901760
    %1093 = vmatmul.f32.gmra.mxu0 %v1092
    %v1094 = vpop.f32.mrf.mxu0
    %v1095 = vadd.f32 %v1029, %v1094
    %1096 = vdwg.mxu0
    %1097 = vmatpush.msra.mxu0 0.0
    %1098 = vmatpush.msra.mxu0 0.0
    %1099 = vmatpush.msra.mxu0 0.0
    %1100 = vmatpush.msra.mxu0 0.0
    %1101 = vmatpush.msra.mxu0 0.0
    %1102 = vmatpush.msra.mxu0 0.0
    %1103 = vmatpush.msra.mxu0 0.0
    %v1104 = vand.u32 %v235, 4294901760
    %v1105 = vsub.f32 %v235, %v1104
    %1106 = vmatpush.msra.mxu0 %v1105
    %v1107 = vand.u32 %v214, 4294901760
    %v1108 = vsub.f32 %v214, %v1107
    %1109 = vmatpush.msra.mxu0 %v1108
    %v1110 = vand.u32 %v193, 4294901760
    %v1111 = vsub.f32 %v193, %v1110
    %1112 = vmatpush.msra.mxu0 %v1111
    %v1113 = vand.u32 %v172, 4294901760
    %v1114 = vsub.f32 %v172, %v1113
    %1115 = vmatpush.msra.mxu0 %v1114
    %v1116 = vand.u32 %v65, 4294901760
    %v1117 = vsub.f32 %v65, %v1116
    %1118 = vmatpush.msra.mxu0 %v1117
    %v1119 = vand.u32 %v151, 4294901760
    %v1120 = vsub.f32 %v151, %v1119
    %1121 = vmatpush.msra.mxu0 %v1120
    %v1122 = vand.u32 %v130, 4294901760
    %v1123 = vsub.f32 %v130, %v1122
    %1124 = vmatpush.msra.mxu0 %v1123
    %v1125 = vand.u32 %v109, 4294901760
    %v1126 = vsub.f32 %v109, %v1125
    %1127 = vmatpush.msra.mxu0 %v1126
    %v1128 = vand.u32 %v88, 4294901760
    %v1129 = vsub.f32 %v88, %v1128
    %1130 = vmatpush.msra.mxu0 %v1129
    %v1131 = vand.u32 %v245, 4294901760
    %v1132 = vsub.f32 %v245, %v1131
    %1133 = vmatmul.f32.gmra.mxu0 %v1132
    %v1134 = vpop.f32.mrf.mxu0
    %v1135 = vadd.f32 %v1095, %v1134
    %1136 = vdwg.mxu0
    %1137 = vmatpush.msra.mxu0 0.0
    %1138 = vmatpush.msra.mxu0 0.0
    %1139 = vmatpush.msra.mxu0 0.0
    %1140 = vmatpush.msra.mxu0 0.0
    %1141 = vmatpush.msra.mxu0 0.0
    %1142 = vmatpush.msra.mxu0 0.0
    %1143 = vmatpush.msra.mxu0 0.0
    %v1144 = vand.u32 %v235, 4294901760
    %1145 = vmatpush.msra.mxu0 %v1144
    %v1146 = vand.u32 %v214, 4294901760
    %1147 = vmatpush.msra.mxu0 %v1146
    %v1148 = vand.u32 %v193, 4294901760
    %1149 = vmatpush.msra.mxu0 %v1148
    %v1150 = vand.u32 %v172, 4294901760
    %1151 = vmatpush.msra.mxu0 %v1150
    %v1152 = vand.u32 %v65, 4294901760
    %1153 = vmatpush.msra.mxu0 %v1152
    %v1154 = vand.u32 %v151, 4294901760
    %1155 = vmatpush.msra.mxu0 %v1154
    %v1156 = vand.u32 %v130, 4294901760
    %1157 = vmatpush.msra.mxu0 %v1156
    %v1158 = vand.u32 %v109, 4294901760
    %1159 = vmatpush.msra.mxu0 %v1158
    %v1160 = vand.u32 %v88, 4294901760
    %1161 = vmatpush.msra.mxu0 %v1160
    %v1162 = vand.u32 %v245, 4294901760
    %v1163 = vsub.f32 %v245, %v1162
    %v1164 = vand.u32 %v1163, 4294901760
    %1165 = vmatmul.f32.gmra.mxu0 %v1164
    %v1166 = vpop.f32.mrf.mxu0
    %v1167 = vadd.f32 %v1135, %v1166
    %1168 = vdwg.mxu0
    %1169 = vmatpush.msra.mxu0 0.0
    %1170 = vmatpush.msra.mxu0 0.0
    %1171 = vmatpush.msra.mxu0 0.0
    %1172 = vmatpush.msra.mxu0 0.0
    %1173 = vmatpush.msra.mxu0 0.0
    %1174 = vmatpush.msra.mxu0 0.0
    %1175 = vmatpush.msra.mxu0 0.0
    %v1176 = vand.u32 %v235, 4294901760
    %v1177 = vsub.f32 %v235, %v1176
    %v1178 = vand.u32 %v1177, 4294901760
    %1179 = vmatpush.msra.mxu0 %v1178
    %v1180 = vand.u32 %v214, 4294901760
    %v1181 = vsub.f32 %v214, %v1180
    %v1182 = vand.u32 %v1181, 4294901760
    %1183 = vmatpush.msra.mxu0 %v1182
    %v1184 = vand.u32 %v193, 4294901760
    %v1185 = vsub.f32 %v193, %v1184
    %v1186 = vand.u32 %v1185, 4294901760
    %1187 = vmatpush.msra.mxu0 %v1186
    %v1188 = vand.u32 %v172, 4294901760
    %v1189 = vsub.f32 %v172, %v1188
    %v1190 = vand.u32 %v1189, 4294901760
    %1191 = vmatpush.msra.mxu0 %v1190
    %v1192 = vand.u32 %v65, 4294901760
    %v1193 = vsub.f32 %v65, %v1192
    %v1194 = vand.u32 %v1193, 4294901760
    %1195 = vmatpush.msra.mxu0 %v1194
    %v1196 = vand.u32 %v151, 4294901760
    %v1197 = vsub.f32 %v151, %v1196
    %v1198 = vand.u32 %v1197, 4294901760
    %1199 = vmatpush.msra.mxu0 %v1198
    %v1200 = vand.u32 %v130, 4294901760
    %v1201 = vsub.f32 %v130, %v1200
    %v1202 = vand.u32 %v1201, 4294901760
    %1203 = vmatpush.msra.mxu0 %v1202
    %v1204 = vand.u32 %v109, 4294901760
    %v1205 = vsub.f32 %v109, %v1204
    %v1206 = vand.u32 %v1205, 4294901760
    %1207 = vmatpush.msra.mxu0 %v1206
    %v1208 = vand.u32 %v88, 4294901760
    %v1209 = vsub.f32 %v88, %v1208
    %v1210 = vand.u32 %v1209, 4294901760
    %1211 = vmatpush.msra.mxu0 %v1210
    %v1212 = vand.u32 %v245, 4294901760
    %1213 = vmatmul.f32.gmra.mxu0 %v1212
    %v1214 = vpop.f32.mrf.mxu0
    %v1215 = vadd.f32 %v1167, %v1214
    %1216 = vdwg.mxu0
    %1217 = vmatpush.msra.mxu0 0.0
    %1218 = vmatpush.msra.mxu0 0.0
    %1219 = vmatpush.msra.mxu0 0.0
    %1220 = vmatpush.msra.mxu0 0.0
    %1221 = vmatpush.msra.mxu0 0.0
    %1222 = vmatpush.msra.mxu0 0.0
    %1223 = vmatpush.msra.mxu0 0.0
    %v1224 = vand.u32 %v235, 4294901760
    %1225 = vmatpush.msra.mxu0 %v1224
    %v1226 = vand.u32 %v214, 4294901760
    %1227 = vmatpush.msra.mxu0 %v1226
    %v1228 = vand.u32 %v193, 4294901760
    %1229 = vmatpush.msra.mxu0 %v1228
    %v1230 = vand.u32 %v172, 4294901760
    %1231 = vmatpush.msra.mxu0 %v1230
    %v1232 = vand.u32 %v65, 4294901760
    %1233 = vmatpush.msra.mxu0 %v1232
    %v1234 = vand.u32 %v151, 4294901760
    %1235 = vmatpush.msra.mxu0 %v1234
    %v1236 = vand.u32 %v130, 4294901760
    %1237 = vmatpush.msra.mxu0 %v1236
    %v1238 = vand.u32 %v109, 4294901760
    %1239 = vmatpush.msra.mxu0 %v1238
    %v1240 = vand.u32 %v88, 4294901760
    %1241 = vmatpush.msra.mxu0 %v1240
    %v1242 = vand.u32 %v245, 4294901760
    %1243 = vmatmul.f32.gmra.mxu0 %v1242
    %v1244 = vpop.f32.mrf.mxu0
    %v1245 = vadd.f32 %v1215, %v1244
    %1246 = vdwg.mxu0
    %v1247 = vmax.f32 %v495, 0.0
    %v1248 = vmax.f32 %v745, 0.0
    %v1249 = vmax.f32 %v995, 0.0
    %v1250 = vmax.f32 %v1245, 0.0
    %1251 = vrot.lane.b32.xlu0 %v1247, 17
    %v1252 = vpop.permute.xlu0 %1251
    %1253 = vrot.lane.b32.xlu0 %v1248, 17
    %v1254 = vpop.permute.xlu0 %1253
    %1255 = vrot.lane.b32.xlu0 %v1249, 17
    %v1256 = vpop.permute.xlu0 %1255
    %1257 = vrot.lane.b32.xlu0 %v1250, 17
    %v1258 = vpop.permute.xlu0 %1257
    %v1259 = vsel %vm76, %v1256, %v1258
    %v1260 = vsel %vm76, %v1254, %v1256
    %v1261 = vsel %vm76, %v1252, %v1254
    %v1262 = vsel %vm76, %v1258, %v1252
    %v1263 = vmul.f32 %v1262, %v81
    %v1264 = vmul.f32 %v1261, %v82
    %v1265 = vmul.f32 %v1260, %v83
    %v1266 = vmul.f32 %v1259, %v84
    %1267 = vrot.lane.b32.xlu0 %v1247, 16
    %v1268 = vpop.permute.xlu0 %1267
    %1269 = vrot.lane.b32.xlu0 %v1248, 16
    %v1270 = vpop.permute.xlu0 %1269
    %1271 = vrot.lane.b32.xlu0 %v1249, 16
    %v1272 = vpop.permute.xlu0 %1271
    %1273 = vrot.lane.b32.xlu0 %v1250, 16
    %v1274 = vpop.permute.xlu0 %1273
    %v1275 = vsel %vm97, %v1272, %v1274
    %v1276 = vsel %vm97, %v1270, %v1272
    %v1277 = vsel %vm97, %v1268, %v1270
    %v1278 = vsel %vm97, %v1274, %v1268
    %v1279 = vmul.f32 %v1278, %v102
    %v1280 = vmul.f32 %v1277, %v103
    %v1281 = vmul.f32 %v1276, %v104
    %v1282 = vmul.f32 %v1275, %v105
    %1283 = vrot.lane.b32.xlu0 %v1247, 15
    %v1284 = vpop.permute.xlu0 %1283
    %1285 = vrot.lane.b32.xlu0 %v1248, 15
    %v1286 = vpop.permute.xlu0 %1285
    %1287 = vrot.lane.b32.xlu0 %v1249, 15
    %v1288 = vpop.permute.xlu0 %1287
    %1289 = vrot.lane.b32.xlu0 %v1250, 15
    %v1290 = vpop.permute.xlu0 %1289
    %v1291 = vsel %vm118, %v1288, %v1290
    %v1292 = vsel %vm118, %v1286, %v1288
    %v1293 = vsel %vm118, %v1284, %v1286
    %v1294 = vsel %vm118, %v1290, %v1284
    %v1295 = vmul.f32 %v1294, %v123
    %v1296 = vmul.f32 %v1293, %v124
    %v1297 = vmul.f32 %v1292, %v125
    %v1298 = vmul.f32 %v1291, %v126
    %1299 = vrot.lane.b32.xlu0 %v1247, 1
    %v1300 = vpop.permute.xlu0 %1299
    %1301 = vrot.lane.b32.xlu0 %v1248, 1
    %v1302 = vpop.permute.xlu0 %1301
    %1303 = vrot.lane.b32.xlu0 %v1249, 1
    %v1304 = vpop.permute.xlu0 %1303
    %1305 = vrot.lane.b32.xlu0 %v1250, 1
    %v1306 = vpop.permute.xlu0 %1305
    %v1307 = vsel %vm139, %v1304, %v1306
    %v1308 = vsel %vm139, %v1302, %v1304
    %v1309 = vsel %vm139, %v1300, %v1302
    %v1310 = vsel %vm139, %v1306, %v1300
    %v1311 = vmul.f32 %v1310, %v144
    %v1312 = vmul.f32 %v1309, %v145
    %v1313 = vmul.f32 %v1308, %v146
    %v1314 = vmul.f32 %v1307, %v147
    %1315 = vrot.lane.b32.xlu0 %v1247, 127
    %v1316 = vpop.permute.xlu0 %1315
    %1317 = vrot.lane.b32.xlu0 %v1248, 127
    %v1318 = vpop.permute.xlu0 %1317
    %1319 = vrot.lane.b32.xlu0 %v1249, 127
    %v1320 = vpop.permute.xlu0 %1319
    %1321 = vrot.lane.b32.xlu0 %v1250, 127
    %v1322 = vpop.permute.xlu0 %1321
    %v1323 = vsel %vm160, %v1320, %v1322
    %v1324 = vsel %vm160, %v1318, %v1320
    %v1325 = vsel %vm160, %v1316, %v1318
    %v1326 = vsel %vm160, %v1322, %v1316
    %v1327 = vmul.f32 %v1325, %v165
    %v1328 = vmul.f32 %v1324, %v166
    %v1329 = vmul.f32 %v1323, %v167
    %v1330 = vmul.f32 %v1326, %v168
    %1331 = vrot.lane.b32.xlu0 %v1247, 113
    %v1332 = vpop.permute.xlu0 %1331
    %1333 = vrot.lane.b32.xlu0 %v1248, 113
    %v1334 = vpop.permute.xlu0 %1333
    %1335 = vrot.lane.b32.xlu0 %v1249, 113
    %v1336 = vpop.permute.xlu0 %1335
    %1337 = vrot.lane.b32.xlu0 %v1250, 113
    %v1338 = vpop.permute.xlu0 %1337
    %v1339 = vsel %vm181, %v1336, %v1338
    %v1340 = vsel %vm181, %v1334, %v1336
    %v1341 = vsel %vm181, %v1332, %v1334
    %v1342 = vsel %vm181, %v1338, %v1332
    %v1343 = vmul.f32 %v1341, %v186
    %v1344 = vmul.f32 %v1340, %v187
    %v1345 = vmul.f32 %v1339, %v188
    %v1346 = vmul.f32 %v1342, %v189
    %1347 = vrot.lane.b32.xlu0 %v1247, 112
    %v1348 = vpop.permute.xlu0 %1347
    %1349 = vrot.lane.b32.xlu0 %v1248, 112
    %v1350 = vpop.permute.xlu0 %1349
    %1351 = vrot.lane.b32.xlu0 %v1249, 112
    %v1352 = vpop.permute.xlu0 %1351
    %1353 = vrot.lane.b32.xlu0 %v1250, 112
    %v1354 = vpop.permute.xlu0 %1353
    %v1355 = vsel %vm202, %v1352, %v1354
    %v1356 = vsel %vm202, %v1350, %v1352
    %v1357 = vsel %vm202, %v1348, %v1350
    %v1358 = vsel %vm202, %v1354, %v1348
    %v1359 = vmul.f32 %v1357, %v207
    %v1360 = vmul.f32 %v1356, %v208
    %v1361 = vmul.f32 %v1355, %v209
    %v1362 = vmul.f32 %v1358, %v210
    %1363 = vrot.lane.b32.xlu0 %v1247, 111
    %v1364 = vpop.permute.xlu0 %1363
    %1365 = vrot.lane.b32.xlu0 %v1248, 111
    %v1366 = vpop.permute.xlu0 %1365
    %1367 = vrot.lane.b32.xlu0 %v1249, 111
    %v1368 = vpop.permute.xlu0 %1367
    %1369 = vrot.lane.b32.xlu0 %v1250, 111
    %v1370 = vpop.permute.xlu0 %1369
    %v1371 = vsel %vm223, %v1368, %v1370
    %v1372 = vsel %vm223, %v1366, %v1368
    %v1373 = vsel %vm223, %v1364, %v1366
    %v1374 = vsel %vm223, %v1370, %v1364
    %v1375 = vmul.f32 %v1373, %v228
    %v1376 = vmul.f32 %v1372, %v229
    %v1377 = vmul.f32 %v1371, %v230
    %v1378 = vmul.f32 %v1374, %v231
    %v1379 = vld [vmem:[%s4] sm:$0xff]
    %v1380 = vld [vmem:[%s5] sm:$0xff]
    %1382 = vset.pattern.permute.xlu0 0
    %1383 = vperm.xlu0 %1382, %v1380
    %v1384 = vpop.permute.xlu0 %1383
    %v1387 = vsel %vm243, %v1379, 0
    %1389 = vmatpush.msra.mxu0 0.0
    %1390 = vmatpush.msra.mxu0 0.0
    %1391 = vmatpush.msra.mxu0 0.0
    %1392 = vmatpush.msra.mxu0 0.0
    %1393 = vmatpush.msra.mxu0 0.0
    %1394 = vmatpush.msra.mxu0 0.0
    %1395 = vmatpush.msra.mxu0 0.0
    %v1396 = vand.u32 %v1375, 4294901760
    %1397 = vmatpush.msra.mxu0 %v1396
    %v1398 = vand.u32 %v1359, 4294901760
    %1399 = vmatpush.msra.mxu0 %v1398
    %v1400 = vand.u32 %v1343, 4294901760
    %1401 = vmatpush.msra.mxu0 %v1400
    %v1402 = vand.u32 %v1327, 4294901760
    %1403 = vmatpush.msra.mxu0 %v1402
    %v1404 = vand.u32 %v1247, 4294901760
    %1405 = vmatpush.msra.mxu0 %v1404
    %v1406 = vand.u32 %v1311, 4294901760
    %1407 = vmatpush.msra.mxu0 %v1406
    %v1408 = vand.u32 %v1295, 4294901760
    %1409 = vmatpush.msra.mxu0 %v1408
    %v1410 = vand.u32 %v1279, 4294901760
    %1411 = vmatpush.msra.mxu0 %v1410
    %v1412 = vand.u32 %v1263, 4294901760
    %1413 = vmatpush.msra.mxu0 %v1412
    %v1414 = vand.u32 %v1387, 4294901760
    %v1415 = vsub.f32 %v1387, %v1414
    %v1416 = vand.u32 %v1415, 4294901760
    %v1417 = vsub.f32 %v1415, %v1416
    %v1418 = vand.u32 %v1417, 4294901760
    %1419 = vmatmul.f32.gmra.mxu0 %v1418
    %v1420 = vpop.f32.mrf.mxu0
    %v1421 = vadd.f32 %v1384, %v1420
    %1422 = vdwg.mxu0
    %1423 = vmatpush.msra.mxu0 0.0
    %1424 = vmatpush.msra.mxu0 0.0
    %1425 = vmatpush.msra.mxu0 0.0
    %1426 = vmatpush.msra.mxu0 0.0
    %1427 = vmatpush.msra.mxu0 0.0
    %1428 = vmatpush.msra.mxu0 0.0
    %1429 = vmatpush.msra.mxu0 0.0
    %v1430 = vand.u32 %v1375, 4294901760
    %v1431 = vsub.f32 %v1375, %v1430
    %v1432 = vand.u32 %v1431, 4294901760
    %v1433 = vsub.f32 %v1431, %v1432
    %v1434 = vand.u32 %v1433, 4294901760
    %1435 = vmatpush.msra.mxu0 %v1434
    %v1436 = vand.u32 %v1359, 4294901760
    %v1437 = vsub.f32 %v1359, %v1436
    %v1438 = vand.u32 %v1437, 4294901760
    %v1439 = vsub.f32 %v1437, %v1438
    %v1440 = vand.u32 %v1439, 4294901760
    %1441 = vmatpush.msra.mxu0 %v1440
    %v1442 = vand.u32 %v1343, 4294901760
    %v1443 = vsub.f32 %v1343, %v1442
    %v1444 = vand.u32 %v1443, 4294901760
    %v1445 = vsub.f32 %v1443, %v1444
    %v1446 = vand.u32 %v1445, 4294901760
    %1447 = vmatpush.msra.mxu0 %v1446
    %v1448 = vand.u32 %v1327, 4294901760
    %v1449 = vsub.f32 %v1327, %v1448
    %v1450 = vand.u32 %v1449, 4294901760
    %v1451 = vsub.f32 %v1449, %v1450
    %v1452 = vand.u32 %v1451, 4294901760
    %1453 = vmatpush.msra.mxu0 %v1452
    %v1454 = vand.u32 %v1247, 4294901760
    %v1455 = vsub.f32 %v1247, %v1454
    %v1456 = vand.u32 %v1455, 4294901760
    %v1457 = vsub.f32 %v1455, %v1456
    %v1458 = vand.u32 %v1457, 4294901760
    %1459 = vmatpush.msra.mxu0 %v1458
    %v1460 = vand.u32 %v1311, 4294901760
    %v1461 = vsub.f32 %v1311, %v1460
    %v1462 = vand.u32 %v1461, 4294901760
    %v1463 = vsub.f32 %v1461, %v1462
    %v1464 = vand.u32 %v1463, 4294901760
    %1465 = vmatpush.msra.mxu0 %v1464
    %v1466 = vand.u32 %v1295, 4294901760
    %v1467 = vsub.f32 %v1295, %v1466
    %v1468 = vand.u32 %v1467, 4294901760
    %v1469 = vsub.f32 %v1467, %v1468
    %v1470 = vand.u32 %v1469, 4294901760
    %1471 = vmatpush.msra.mxu0 %v1470
    %v1472 = vand.u32 %v1279, 4294901760
    %v1473 = vsub.f32 %v1279, %v1472
    %v1474 = vand.u32 %v1473, 4294901760
    %v1475 = vsub.f32 %v1473, %v1474
    %v1476 = vand.u32 %v1475, 4294901760
    %1477 = vmatpush.msra.mxu0 %v1476
    %v1478 = vand.u32 %v1263, 4294901760
    %v1479 = vsub.f32 %v1263, %v1478
    %v1480 = vand.u32 %v1479, 4294901760
    %v1481 = vsub.f32 %v1479, %v1480
    %v1482 = vand.u32 %v1481, 4294901760
    %1483 = vmatpush.msra.mxu0 %v1482
    %v1484 = vand.u32 %v1387, 4294901760
    %1485 = vmatmul.f32.gmra.mxu0 %v1484
    %v1486 = vpop.f32.mrf.mxu0
    %v1487 = vadd.f32 %v1421, %v1486
    %1488 = vdwg.mxu0
    %1489 = vmatpush.msra.mxu0 0.0
    %1490 = vmatpush.msra.mxu0 0.0
    %1491 = vmatpush.msra.mxu0 0.0
    %1492 = vmatpush.msra.mxu0 0.0
    %1493 = vmatpush.msra.mxu0 0.0
    %1494 = vmatpush.msra.mxu0 0.0
    %1495 = vmatpush.msra.mxu0 0.0
    %v1496 = vand.u32 %v1375, 4294901760
    %v1497 = vsub.f32 %v1375, %v1496
    %1498 = vmatpush.msra.mxu0 %v1497
    %v1499 = vand.u32 %v1359, 4294901760
    %v1500 = vsub.f32 %v1359, %v1499
    %1501 = vmatpush.msra.mxu0 %v1500
    %v1502 = vand.u32 %v1343, 4294901760
    %v1503 = vsub.f32 %v1343, %v1502
    %1504 = vmatpush.msra.mxu0 %v1503
    %v1505 = vand.u32 %v1327, 4294901760
    %v1506 = vsub.f32 %v1327, %v1505
    %1507 = vmatpush.msra.mxu0 %v1506
    %v1508 = vand.u32 %v1247, 4294901760
    %v1509 = vsub.f32 %v1247, %v1508
    %1510 = vmatpush.msra.mxu0 %v1509
    %v1511 = vand.u32 %v1311, 4294901760
    %v1512 = vsub.f32 %v1311, %v1511
    %1513 = vmatpush.msra.mxu0 %v1512
    %v1514 = vand.u32 %v1295, 4294901760
    %v1515 = vsub.f32 %v1295, %v1514
    %1516 = vmatpush.msra.mxu0 %v1515
    %v1517 = vand.u32 %v1279, 4294901760
    %v1518 = vsub.f32 %v1279, %v1517
    %1519 = vmatpush.msra.mxu0 %v1518
    %v1520 = vand.u32 %v1263, 4294901760
    %v1521 = vsub.f32 %v1263, %v1520
    %1522 = vmatpush.msra.mxu0 %v1521
    %v1523 = vand.u32 %v1387, 4294901760
    %v1524 = vsub.f32 %v1387, %v1523
    %1525 = vmatmul.f32.gmra.mxu0 %v1524
    %v1526 = vpop.f32.mrf.mxu0
    %v1527 = vadd.f32 %v1487, %v1526
    %1528 = vdwg.mxu0
    %1529 = vmatpush.msra.mxu0 0.0
    %1530 = vmatpush.msra.mxu0 0.0
    %1531 = vmatpush.msra.mxu0 0.0
    %1532 = vmatpush.msra.mxu0 0.0
    %1533 = vmatpush.msra.mxu0 0.0
    %1534 = vmatpush.msra.mxu0 0.0
    %1535 = vmatpush.msra.mxu0 0.0
    %v1536 = vand.u32 %v1375, 4294901760
    %1537 = vmatpush.msra.mxu0 %v1536
    %v1538 = vand.u32 %v1359, 4294901760
    %1539 = vmatpush.msra.mxu0 %v1538
    %v1540 = vand.u32 %v1343, 4294901760
    %1541 = vmatpush.msra.mxu0 %v1540
    %v1542 = vand.u32 %v1327, 4294901760
    %1543 = vmatpush.msra.mxu0 %v1542
    %v1544 = vand.u32 %v1247, 4294901760
    %1545 = vmatpush.msra.mxu0 %v1544
    %v1546 = vand.u32 %v1311, 4294901760
    %1547 = vmatpush.msra.mxu0 %v1546
    %v1548 = vand.u32 %v1295, 4294901760
    %1549 = vmatpush.msra.mxu0 %v1548
    %v1550 = vand.u32 %v1279, 4294901760
    %1551 = vmatpush.msra.mxu0 %v1550
    %v1552 = vand.u32 %v1263, 4294901760
    %1553 = vmatpush.msra.mxu0 %v1552
    %v1554 = vand.u32 %v1387, 4294901760
    %v1555 = vsub.f32 %v1387, %v1554
    %v1556 = vand.u32 %v1555, 4294901760
    %1557 = vmatmul.f32.gmra.mxu0 %v1556
    %v1558 = vpop.f32.mrf.mxu0
    %v1559 = vadd.f32 %v1527, %v1558
    %1560 = vdwg.mxu0
    %1561 = vmatpush.msra.mxu0 0.0
    %1562 = vmatpush.msra.mxu0 0.0
    %1563 = vmatpush.msra.mxu0 0.0
    %1564 = vmatpush.msra.mxu0 0.0
    %1565 = vmatpush.msra.mxu0 0.0
    %1566 = vmatpush.msra.mxu0 0.0
    %1567 = vmatpush.msra.mxu0 0.0
    %v1568 = vand.u32 %v1375, 4294901760
    %v1569 = vsub.f32 %v1375, %v1568
    %v1570 = vand.u32 %v1569, 4294901760
    %1571 = vmatpush.msra.mxu0 %v1570
    %v1572 = vand.u32 %v1359, 4294901760
    %v1573 = vsub.f32 %v1359, %v1572
    %v1574 = vand.u32 %v1573, 4294901760
    %1575 = vmatpush.msra.mxu0 %v1574
    %v1576 = vand.u32 %v1343, 4294901760
    %v1577 = vsub.f32 %v1343, %v1576
    %v1578 = vand.u32 %v1577, 4294901760
    %1579 = vmatpush.msra.mxu0 %v1578
    %v1580 = vand.u32 %v1327, 4294901760
    %v1581 = vsub.f32 %v1327, %v1580
    %v1582 = vand.u32 %v1581, 4294901760
    %1583 = vmatpush.msra.mxu0 %v1582
    %v1584 = vand.u32 %v1247, 4294901760
    %v1585 = vsub.f32 %v1247, %v1584
    %v1586 = vand.u32 %v1585, 4294901760
    %1587 = vmatpush.msra.mxu0 %v1586
    %v1588 = vand.u32 %v1311, 4294901760
    %v1589 = vsub.f32 %v1311, %v1588
    %v1590 = vand.u32 %v1589, 4294901760
    %1591 = vmatpush.msra.mxu0 %v1590
    %v1592 = vand.u32 %v1295, 4294901760
    %v1593 = vsub.f32 %v1295, %v1592
    %v1594 = vand.u32 %v1593, 4294901760
    %1595 = vmatpush.msra.mxu0 %v1594
    %v1596 = vand.u32 %v1279, 4294901760
    %v1597 = vsub.f32 %v1279, %v1596
    %v1598 = vand.u32 %v1597, 4294901760
    %1599 = vmatpush.msra.mxu0 %v1598
    %v1600 = vand.u32 %v1263, 4294901760
    %v1601 = vsub.f32 %v1263, %v1600
    %v1602 = vand.u32 %v1601, 4294901760
    %1603 = vmatpush.msra.mxu0 %v1602
    %v1604 = vand.u32 %v1387, 4294901760
    %1605 = vmatmul.f32.gmra.mxu0 %v1604
    %v1606 = vpop.f32.mrf.mxu0
    %v1607 = vadd.f32 %v1559, %v1606
    %1608 = vdwg.mxu0
    %1609 = vmatpush.msra.mxu0 0.0
    %1610 = vmatpush.msra.mxu0 0.0
    %1611 = vmatpush.msra.mxu0 0.0
    %1612 = vmatpush.msra.mxu0 0.0
    %1613 = vmatpush.msra.mxu0 0.0
    %1614 = vmatpush.msra.mxu0 0.0
    %1615 = vmatpush.msra.mxu0 0.0
    %v1616 = vand.u32 %v1375, 4294901760
    %1617 = vmatpush.msra.mxu0 %v1616
    %v1618 = vand.u32 %v1359, 4294901760
    %1619 = vmatpush.msra.mxu0 %v1618
    %v1620 = vand.u32 %v1343, 4294901760
    %1621 = vmatpush.msra.mxu0 %v1620
    %v1622 = vand.u32 %v1327, 4294901760
    %1623 = vmatpush.msra.mxu0 %v1622
    %v1624 = vand.u32 %v1247, 4294901760
    %1625 = vmatpush.msra.mxu0 %v1624
    %v1626 = vand.u32 %v1311, 4294901760
    %1627 = vmatpush.msra.mxu0 %v1626
    %v1628 = vand.u32 %v1295, 4294901760
    %1629 = vmatpush.msra.mxu0 %v1628
    %v1630 = vand.u32 %v1279, 4294901760
    %1631 = vmatpush.msra.mxu0 %v1630
    %v1632 = vand.u32 %v1263, 4294901760
    %1633 = vmatpush.msra.mxu0 %v1632
    %v1634 = vand.u32 %v1387, 4294901760
    %1635 = vmatmul.f32.gmra.mxu0 %v1634
    %v1636 = vpop.f32.mrf.mxu0
    %v1637 = vadd.f32 %v1607, %v1636
    %1638 = vdwg.mxu0
    %1639 = vmatpush.msra.mxu0 0.0
    %1640 = vmatpush.msra.mxu0 0.0
    %1641 = vmatpush.msra.mxu0 0.0
    %1642 = vmatpush.msra.mxu0 0.0
    %1643 = vmatpush.msra.mxu0 0.0
    %1644 = vmatpush.msra.mxu0 0.0
    %1645 = vmatpush.msra.mxu0 0.0
    %v1646 = vand.u32 %v1376, 4294901760
    %1647 = vmatpush.msra.mxu0 %v1646
    %v1648 = vand.u32 %v1360, 4294901760
    %1649 = vmatpush.msra.mxu0 %v1648
    %v1650 = vand.u32 %v1344, 4294901760
    %1651 = vmatpush.msra.mxu0 %v1650
    %v1652 = vand.u32 %v1328, 4294901760
    %1653 = vmatpush.msra.mxu0 %v1652
    %v1654 = vand.u32 %v1248, 4294901760
    %1655 = vmatpush.msra.mxu0 %v1654
    %v1656 = vand.u32 %v1312, 4294901760
    %1657 = vmatpush.msra.mxu0 %v1656
    %v1658 = vand.u32 %v1296, 4294901760
    %1659 = vmatpush.msra.mxu0 %v1658
    %v1660 = vand.u32 %v1280, 4294901760
    %1661 = vmatpush.msra.mxu0 %v1660
    %v1662 = vand.u32 %v1264, 4294901760
    %1663 = vmatpush.msra.mxu0 %v1662
    %v1664 = vand.u32 %v1387, 4294901760
    %v1665 = vsub.f32 %v1387, %v1664
    %v1666 = vand.u32 %v1665, 4294901760
    %v1667 = vsub.f32 %v1665, %v1666
    %v1668 = vand.u32 %v1667, 4294901760
    %1669 = vmatmul.f32.gmra.mxu0 %v1668
    %v1670 = vpop.f32.mrf.mxu0
    %v1671 = vadd.f32 %v1384, %v1670
    %1672 = vdwg.mxu0
    %1673 = vmatpush.msra.mxu0 0.0
    %1674 = vmatpush.msra.mxu0 0.0
    %1675 = vmatpush.msra.mxu0 0.0
    %1676 = vmatpush.msra.mxu0 0.0
    %1677 = vmatpush.msra.mxu0 0.0
    %1678 = vmatpush.msra.mxu0 0.0
    %1679 = vmatpush.msra.mxu0 0.0
    %v1680 = vand.u32 %v1376, 4294901760
    %v1681 = vsub.f32 %v1376, %v1680
    %v1682 = vand.u32 %v1681, 4294901760
    %v1683 = vsub.f32 %v1681, %v1682
    %v1684 = vand.u32 %v1683, 4294901760
    %1685 = vmatpush.msra.mxu0 %v1684
    %v1686 = vand.u32 %v1360, 4294901760
    %v1687 = vsub.f32 %v1360, %v1686
    %v1688 = vand.u32 %v1687, 4294901760
    %v1689 = vsub.f32 %v1687, %v1688
    %v1690 = vand.u32 %v1689, 4294901760
    %1691 = vmatpush.msra.mxu0 %v1690
    %v1692 = vand.u32 %v1344, 4294901760
    %v1693 = vsub.f32 %v1344, %v1692
    %v1694 = vand.u32 %v1693, 4294901760
    %v1695 = vsub.f32 %v1693, %v1694
    %v1696 = vand.u32 %v1695, 4294901760
    %1697 = vmatpush.msra.mxu0 %v1696
    %v1698 = vand.u32 %v1328, 4294901760
    %v1699 = vsub.f32 %v1328, %v1698
    %v1700 = vand.u32 %v1699, 4294901760
    %v1701 = vsub.f32 %v1699, %v1700
    %v1702 = vand.u32 %v1701, 4294901760
    %1703 = vmatpush.msra.mxu0 %v1702
    %v1704 = vand.u32 %v1248, 4294901760
    %v1705 = vsub.f32 %v1248, %v1704
    %v1706 = vand.u32 %v1705, 4294901760
    %v1707 = vsub.f32 %v1705, %v1706
    %v1708 = vand.u32 %v1707, 4294901760
    %1709 = vmatpush.msra.mxu0 %v1708
    %v1710 = vand.u32 %v1312, 4294901760
    %v1711 = vsub.f32 %v1312, %v1710
    %v1712 = vand.u32 %v1711, 4294901760
    %v1713 = vsub.f32 %v1711, %v1712
    %v1714 = vand.u32 %v1713, 4294901760
    %1715 = vmatpush.msra.mxu0 %v1714
    %v1716 = vand.u32 %v1296, 4294901760
    %v1717 = vsub.f32 %v1296, %v1716
    %v1718 = vand.u32 %v1717, 4294901760
    %v1719 = vsub.f32 %v1717, %v1718
    %v1720 = vand.u32 %v1719, 4294901760
    %1721 = vmatpush.msra.mxu0 %v1720
    %v1722 = vand.u32 %v1280, 4294901760
    %v1723 = vsub.f32 %v1280, %v1722
    %v1724 = vand.u32 %v1723, 4294901760
    %v1725 = vsub.f32 %v1723, %v1724
    %v1726 = vand.u32 %v1725, 4294901760
    %1727 = vmatpush.msra.mxu0 %v1726
    %v1728 = vand.u32 %v1264, 4294901760
    %v1729 = vsub.f32 %v1264, %v1728
    %v1730 = vand.u32 %v1729, 4294901760
    %v1731 = vsub.f32 %v1729, %v1730
    %v1732 = vand.u32 %v1731, 4294901760
    %1733 = vmatpush.msra.mxu0 %v1732
    %v1734 = vand.u32 %v1387, 4294901760
    %1735 = vmatmul.f32.gmra.mxu0 %v1734
    %v1736 = vpop.f32.mrf.mxu0
    %v1737 = vadd.f32 %v1671, %v1736
    %1738 = vdwg.mxu0
    %1739 = vmatpush.msra.mxu0 0.0
    %1740 = vmatpush.msra.mxu0 0.0
    %1741 = vmatpush.msra.mxu0 0.0
    %1742 = vmatpush.msra.mxu0 0.0
    %1743 = vmatpush.msra.mxu0 0.0
    %1744 = vmatpush.msra.mxu0 0.0
    %1745 = vmatpush.msra.mxu0 0.0
    %v1746 = vand.u32 %v1376, 4294901760
    %v1747 = vsub.f32 %v1376, %v1746
    %1748 = vmatpush.msra.mxu0 %v1747
    %v1749 = vand.u32 %v1360, 4294901760
    %v1750 = vsub.f32 %v1360, %v1749
    %1751 = vmatpush.msra.mxu0 %v1750
    %v1752 = vand.u32 %v1344, 4294901760
    %v1753 = vsub.f32 %v1344, %v1752
    %1754 = vmatpush.msra.mxu0 %v1753
    %v1755 = vand.u32 %v1328, 4294901760
    %v1756 = vsub.f32 %v1328, %v1755
    %1757 = vmatpush.msra.mxu0 %v1756
    %v1758 = vand.u32 %v1248, 4294901760
    %v1759 = vsub.f32 %v1248, %v1758
    %1760 = vmatpush.msra.mxu0 %v1759
    %v1761 = vand.u32 %v1312, 4294901760
    %v1762 = vsub.f32 %v1312, %v1761
    %1763 = vmatpush.msra.mxu0 %v1762
    %v1764 = vand.u32 %v1296, 4294901760
    %v1765 = vsub.f32 %v1296, %v1764
    %1766 = vmatpush.msra.mxu0 %v1765
    %v1767 = vand.u32 %v1280, 4294901760
    %v1768 = vsub.f32 %v1280, %v1767
    %1769 = vmatpush.msra.mxu0 %v1768
    %v1770 = vand.u32 %v1264, 4294901760
    %v1771 = vsub.f32 %v1264, %v1770
    %1772 = vmatpush.msra.mxu0 %v1771
    %v1773 = vand.u32 %v1387, 4294901760
    %v1774 = vsub.f32 %v1387, %v1773
    %1775 = vmatmul.f32.gmra.mxu0 %v1774
    %v1776 = vpop.f32.mrf.mxu0
    %v1777 = vadd.f32 %v1737, %v1776
    %1778 = vdwg.mxu0
    %1779 = vmatpush.msra.mxu0 0.0
    %1780 = vmatpush.msra.mxu0 0.0
    %1781 = vmatpush.msra.mxu0 0.0
    %1782 = vmatpush.msra.mxu0 0.0
    %1783 = vmatpush.msra.mxu0 0.0
    %1784 = vmatpush.msra.mxu0 0.0
    %1785 = vmatpush.msra.mxu0 0.0
    %v1786 = vand.u32 %v1376, 4294901760
    %1787 = vmatpush.msra.mxu0 %v1786
    %v1788 = vand.u32 %v1360, 4294901760
    %1789 = vmatpush.msra.mxu0 %v1788
    %v1790 = vand.u32 %v1344, 4294901760
    %1791 = vmatpush.msra.mxu0 %v1790
    %v1792 = vand.u32 %v1328, 4294901760
    %1793 = vmatpush.msra.mxu0 %v1792
    %v1794 = vand.u32 %v1248, 4294901760
    %1795 = vmatpush.msra.mxu0 %v1794
    %v1796 = vand.u32 %v1312, 4294901760
    %1797 = vmatpush.msra.mxu0 %v1796
    %v1798 = vand.u32 %v1296, 4294901760
    %1799 = vmatpush.msra.mxu0 %v1798
    %v1800 = vand.u32 %v1280, 4294901760
    %1801 = vmatpush.msra.mxu0 %v1800
    %v1802 = vand.u32 %v1264, 4294901760
    %1803 = vmatpush.msra.mxu0 %v1802
    %v1804 = vand.u32 %v1387, 4294901760
    %v1805 = vsub.f32 %v1387, %v1804
    %v1806 = vand.u32 %v1805, 4294901760
    %1807 = vmatmul.f32.gmra.mxu0 %v1806
    %v1808 = vpop.f32.mrf.mxu0
    %v1809 = vadd.f32 %v1777, %v1808
    %1810 = vdwg.mxu0
    %1811 = vmatpush.msra.mxu0 0.0
    %1812 = vmatpush.msra.mxu0 0.0
    %1813 = vmatpush.msra.mxu0 0.0
    %1814 = vmatpush.msra.mxu0 0.0
    %1815 = vmatpush.msra.mxu0 0.0
    %1816 = vmatpush.msra.mxu0 0.0
    %1817 = vmatpush.msra.mxu0 0.0
    %v1818 = vand.u32 %v1376, 4294901760
    %v1819 = vsub.f32 %v1376, %v1818
    %v1820 = vand.u32 %v1819, 4294901760
    %1821 = vmatpush.msra.mxu0 %v1820
    %v1822 = vand.u32 %v1360, 4294901760
    %v1823 = vsub.f32 %v1360, %v1822
    %v1824 = vand.u32 %v1823, 4294901760
    %1825 = vmatpush.msra.mxu0 %v1824
    %v1826 = vand.u32 %v1344, 4294901760
    %v1827 = vsub.f32 %v1344, %v1826
    %v1828 = vand.u32 %v1827, 4294901760
    %1829 = vmatpush.msra.mxu0 %v1828
    %v1830 = vand.u32 %v1328, 4294901760
    %v1831 = vsub.f32 %v1328, %v1830
    %v1832 = vand.u32 %v1831, 4294901760
    %1833 = vmatpush.msra.mxu0 %v1832
    %v1834 = vand.u32 %v1248, 4294901760
    %v1835 = vsub.f32 %v1248, %v1834
    %v1836 = vand.u32 %v1835, 4294901760
    %1837 = vmatpush.msra.mxu0 %v1836
    %v1838 = vand.u32 %v1312, 4294901760
    %v1839 = vsub.f32 %v1312, %v1838
    %v1840 = vand.u32 %v1839, 4294901760
    %1841 = vmatpush.msra.mxu0 %v1840
    %v1842 = vand.u32 %v1296, 4294901760
    %v1843 = vsub.f32 %v1296, %v1842
    %v1844 = vand.u32 %v1843, 4294901760
    %1845 = vmatpush.msra.mxu0 %v1844
    %v1846 = vand.u32 %v1280, 4294901760
    %v1847 = vsub.f32 %v1280, %v1846
    %v1848 = vand.u32 %v1847, 4294901760
    %1849 = vmatpush.msra.mxu0 %v1848
    %v1850 = vand.u32 %v1264, 4294901760
    %v1851 = vsub.f32 %v1264, %v1850
    %v1852 = vand.u32 %v1851, 4294901760
    %1853 = vmatpush.msra.mxu0 %v1852
    %v1854 = vand.u32 %v1387, 4294901760
    %1855 = vmatmul.f32.gmra.mxu0 %v1854
    %v1856 = vpop.f32.mrf.mxu0
    %v1857 = vadd.f32 %v1809, %v1856
    %1858 = vdwg.mxu0
    %1859 = vmatpush.msra.mxu0 0.0
    %1860 = vmatpush.msra.mxu0 0.0
    %1861 = vmatpush.msra.mxu0 0.0
    %1862 = vmatpush.msra.mxu0 0.0
    %1863 = vmatpush.msra.mxu0 0.0
    %1864 = vmatpush.msra.mxu0 0.0
    %1865 = vmatpush.msra.mxu0 0.0
    %v1866 = vand.u32 %v1376, 4294901760
    %1867 = vmatpush.msra.mxu0 %v1866
    %v1868 = vand.u32 %v1360, 4294901760
    %1869 = vmatpush.msra.mxu0 %v1868
    %v1870 = vand.u32 %v1344, 4294901760
    %1871 = vmatpush.msra.mxu0 %v1870
    %v1872 = vand.u32 %v1328, 4294901760
    %1873 = vmatpush.msra.mxu0 %v1872
    %v1874 = vand.u32 %v1248, 4294901760
    %1875 = vmatpush.msra.mxu0 %v1874
    %v1876 = vand.u32 %v1312, 4294901760
    %1877 = vmatpush.msra.mxu0 %v1876
    %v1878 = vand.u32 %v1296, 4294901760
    %1879 = vmatpush.msra.mxu0 %v1878
    %v1880 = vand.u32 %v1280, 4294901760
    %1881 = vmatpush.msra.mxu0 %v1880
    %v1882 = vand.u32 %v1264, 4294901760
    %1883 = vmatpush.msra.mxu0 %v1882
    %v1884 = vand.u32 %v1387, 4294901760
    %1885 = vmatmul.f32.gmra.mxu0 %v1884
    %v1886 = vpop.f32.mrf.mxu0
    %v1887 = vadd.f32 %v1857, %v1886
    %1888 = vdwg.mxu0
    %1889 = vmatpush.msra.mxu0 0.0
    %1890 = vmatpush.msra.mxu0 0.0
    %1891 = vmatpush.msra.mxu0 0.0
    %1892 = vmatpush.msra.mxu0 0.0
    %1893 = vmatpush.msra.mxu0 0.0
    %1894 = vmatpush.msra.mxu0 0.0
    %1895 = vmatpush.msra.mxu0 0.0
    %v1896 = vand.u32 %v1377, 4294901760
    %1897 = vmatpush.msra.mxu0 %v1896
    %v1898 = vand.u32 %v1361, 4294901760
    %1899 = vmatpush.msra.mxu0 %v1898
    %v1900 = vand.u32 %v1345, 4294901760
    %1901 = vmatpush.msra.mxu0 %v1900
    %v1902 = vand.u32 %v1329, 4294901760
    %1903 = vmatpush.msra.mxu0 %v1902
    %v1904 = vand.u32 %v1249, 4294901760
    %1905 = vmatpush.msra.mxu0 %v1904
    %v1906 = vand.u32 %v1313, 4294901760
    %1907 = vmatpush.msra.mxu0 %v1906
    %v1908 = vand.u32 %v1297, 4294901760
    %1909 = vmatpush.msra.mxu0 %v1908
    %v1910 = vand.u32 %v1281, 4294901760
    %1911 = vmatpush.msra.mxu0 %v1910
    %v1912 = vand.u32 %v1265, 4294901760
    %1913 = vmatpush.msra.mxu0 %v1912
    %v1914 = vand.u32 %v1387, 4294901760
    %v1915 = vsub.f32 %v1387, %v1914
    %v1916 = vand.u32 %v1915, 4294901760
    %v1917 = vsub.f32 %v1915, %v1916
    %v1918 = vand.u32 %v1917, 4294901760
    %1919 = vmatmul.f32.gmra.mxu0 %v1918
    %v1920 = vpop.f32.mrf.mxu0
    %v1921 = vadd.f32 %v1384, %v1920
    %1922 = vdwg.mxu0
    %1923 = vmatpush.msra.mxu0 0.0
    %1924 = vmatpush.msra.mxu0 0.0
    %1925 = vmatpush.msra.mxu0 0.0
    %1926 = vmatpush.msra.mxu0 0.0
    %1927 = vmatpush.msra.mxu0 0.0
    %1928 = vmatpush.msra.mxu0 0.0
    %1929 = vmatpush.msra.mxu0 0.0
    %v1930 = vand.u32 %v1377, 4294901760
    %v1931 = vsub.f32 %v1377, %v1930
    %v1932 = vand.u32 %v1931, 4294901760
    %v1933 = vsub.f32 %v1931, %v1932
    %v1934 = vand.u32 %v1933, 4294901760
    %1935 = vmatpush.msra.mxu0 %v1934
    %v1936 = vand.u32 %v1361, 4294901760
    %v1937 = vsub.f32 %v1361, %v1936
    %v1938 = vand.u32 %v1937, 4294901760
    %v1939 = vsub.f32 %v1937, %v1938
    %v1940 = vand.u32 %v1939, 4294901760
    %1941 = vmatpush.msra.mxu0 %v1940
    %v1942 = vand.u32 %v1345, 4294901760
    %v1943 = vsub.f32 %v1345, %v1942
    %v1944 = vand.u32 %v1943, 4294901760
    %v1945 = vsub.f32 %v1943, %v1944
    %v1946 = vand.u32 %v1945, 4294901760
    %1947 = vmatpush.msra.mxu0 %v1946
    %v1948 = vand.u32 %v1329, 4294901760
    %v1949 = vsub.f32 %v1329, %v1948
    %v1950 = vand.u32 %v1949, 4294901760
    %v1951 = vsub.f32 %v1949, %v1950
    %v1952 = vand.u32 %v1951, 4294901760
    %1953 = vmatpush.msra.mxu0 %v1952
    %v1954 = vand.u32 %v1249, 4294901760
    %v1955 = vsub.f32 %v1249, %v1954
    %v1956 = vand.u32 %v1955, 4294901760
    %v1957 = vsub.f32 %v1955, %v1956
    %v1958 = vand.u32 %v1957, 4294901760
    %1959 = vmatpush.msra.mxu0 %v1958
    %v1960 = vand.u32 %v1313, 4294901760
    %v1961 = vsub.f32 %v1313, %v1960
    %v1962 = vand.u32 %v1961, 4294901760
    %v1963 = vsub.f32 %v1961, %v1962
    %v1964 = vand.u32 %v1963, 4294901760
    %1965 = vmatpush.msra.mxu0 %v1964
    %v1966 = vand.u32 %v1297, 4294901760
    %v1967 = vsub.f32 %v1297, %v1966
    %v1968 = vand.u32 %v1967, 4294901760
    %v1969 = vsub.f32 %v1967, %v1968
    %v1970 = vand.u32 %v1969, 4294901760
    %1971 = vmatpush.msra.mxu0 %v1970
    %v1972 = vand.u32 %v1281, 4294901760
    %v1973 = vsub.f32 %v1281, %v1972
    %v1974 = vand.u32 %v1973, 4294901760
    %v1975 = vsub.f32 %v1973, %v1974
    %v1976 = vand.u32 %v1975, 4294901760
    %1977 = vmatpush.msra.mxu0 %v1976
    %v1978 = vand.u32 %v1265, 4294901760
    %v1979 = vsub.f32 %v1265, %v1978
    %v1980 = vand.u32 %v1979, 4294901760
    %v1981 = vsub.f32 %v1979, %v1980
    %v1982 = vand.u32 %v1981, 4294901760
    %1983 = vmatpush.msra.mxu0 %v1982
    %v1984 = vand.u32 %v1387, 4294901760
    %1985 = vmatmul.f32.gmra.mxu0 %v1984
    %v1986 = vpop.f32.mrf.mxu0
    %v1987 = vadd.f32 %v1921, %v1986
    %1988 = vdwg.mxu0
    %1989 = vmatpush.msra.mxu0 0.0
    %1990 = vmatpush.msra.mxu0 0.0
    %1991 = vmatpush.msra.mxu0 0.0
    %1992 = vmatpush.msra.mxu0 0.0
    %1993 = vmatpush.msra.mxu0 0.0
    %1994 = vmatpush.msra.mxu0 0.0
    %1995 = vmatpush.msra.mxu0 0.0
    %v1996 = vand.u32 %v1377, 4294901760
    %v1997 = vsub.f32 %v1377, %v1996
    %1998 = vmatpush.msra.mxu0 %v1997
    %v1999 = vand.u32 %v1361, 4294901760
    %v2000 = vsub.f32 %v1361, %v1999
    %2001 = vmatpush.msra.mxu0 %v2000
    %v2002 = vand.u32 %v1345, 4294901760
    %v2003 = vsub.f32 %v1345, %v2002
    %2004 = vmatpush.msra.mxu0 %v2003
    %v2005 = vand.u32 %v1329, 4294901760
    %v2006 = vsub.f32 %v1329, %v2005
    %2007 = vmatpush.msra.mxu0 %v2006
    %v2008 = vand.u32 %v1249, 4294901760
    %v2009 = vsub.f32 %v1249, %v2008
    %2010 = vmatpush.msra.mxu0 %v2009
    %v2011 = vand.u32 %v1313, 4294901760
    %v2012 = vsub.f32 %v1313, %v2011
    %2013 = vmatpush.msra.mxu0 %v2012
    %v2014 = vand.u32 %v1297, 4294901760
    %v2015 = vsub.f32 %v1297, %v2014
    %2016 = vmatpush.msra.mxu0 %v2015
    %v2017 = vand.u32 %v1281, 4294901760
    %v2018 = vsub.f32 %v1281, %v2017
    %2019 = vmatpush.msra.mxu0 %v2018
    %v2020 = vand.u32 %v1265, 4294901760
    %v2021 = vsub.f32 %v1265, %v2020
    %2022 = vmatpush.msra.mxu0 %v2021
    %v2023 = vand.u32 %v1387, 4294901760
    %v2024 = vsub.f32 %v1387, %v2023
    %2025 = vmatmul.f32.gmra.mxu0 %v2024
    %v2026 = vpop.f32.mrf.mxu0
    %v2027 = vadd.f32 %v1987, %v2026
    %2028 = vdwg.mxu0
    %2029 = vmatpush.msra.mxu0 0.0
    %2030 = vmatpush.msra.mxu0 0.0
    %2031 = vmatpush.msra.mxu0 0.0
    %2032 = vmatpush.msra.mxu0 0.0
    %2033 = vmatpush.msra.mxu0 0.0
    %2034 = vmatpush.msra.mxu0 0.0
    %2035 = vmatpush.msra.mxu0 0.0
    %v2036 = vand.u32 %v1377, 4294901760
    %2037 = vmatpush.msra.mxu0 %v2036
    %v2038 = vand.u32 %v1361, 4294901760
    %2039 = vmatpush.msra.mxu0 %v2038
    %v2040 = vand.u32 %v1345, 4294901760
    %2041 = vmatpush.msra.mxu0 %v2040
    %v2042 = vand.u32 %v1329, 4294901760
    %2043 = vmatpush.msra.mxu0 %v2042
    %v2044 = vand.u32 %v1249, 4294901760
    %2045 = vmatpush.msra.mxu0 %v2044
    %v2046 = vand.u32 %v1313, 4294901760
    %2047 = vmatpush.msra.mxu0 %v2046
    %v2048 = vand.u32 %v1297, 4294901760
    %2049 = vmatpush.msra.mxu0 %v2048
    %v2050 = vand.u32 %v1281, 4294901760
    %2051 = vmatpush.msra.mxu0 %v2050
    %v2052 = vand.u32 %v1265, 4294901760
    %2053 = vmatpush.msra.mxu0 %v2052
    %v2054 = vand.u32 %v1387, 4294901760
    %v2055 = vsub.f32 %v1387, %v2054
    %v2056 = vand.u32 %v2055, 4294901760
    %2057 = vmatmul.f32.gmra.mxu0 %v2056
    %v2058 = vpop.f32.mrf.mxu0
    %v2059 = vadd.f32 %v2027, %v2058
    %2060 = vdwg.mxu0
    %2061 = vmatpush.msra.mxu0 0.0
    %2062 = vmatpush.msra.mxu0 0.0
    %2063 = vmatpush.msra.mxu0 0.0
    %2064 = vmatpush.msra.mxu0 0.0
    %2065 = vmatpush.msra.mxu0 0.0
    %2066 = vmatpush.msra.mxu0 0.0
    %2067 = vmatpush.msra.mxu0 0.0
    %v2068 = vand.u32 %v1377, 4294901760
    %v2069 = vsub.f32 %v1377, %v2068
    %v2070 = vand.u32 %v2069, 4294901760
    %2071 = vmatpush.msra.mxu0 %v2070
    %v2072 = vand.u32 %v1361, 4294901760
    %v2073 = vsub.f32 %v1361, %v2072
    %v2074 = vand.u32 %v2073, 4294901760
    %2075 = vmatpush.msra.mxu0 %v2074
    %v2076 = vand.u32 %v1345, 4294901760
    %v2077 = vsub.f32 %v1345, %v2076
    %v2078 = vand.u32 %v2077, 4294901760
    %2079 = vmatpush.msra.mxu0 %v2078
    %v2080 = vand.u32 %v1329, 4294901760
    %v2081 = vsub.f32 %v1329, %v2080
    %v2082 = vand.u32 %v2081, 4294901760
    %2083 = vmatpush.msra.mxu0 %v2082
    %v2084 = vand.u32 %v1249, 4294901760
    %v2085 = vsub.f32 %v1249, %v2084
    %v2086 = vand.u32 %v2085, 4294901760
    %2087 = vmatpush.msra.mxu0 %v2086
    %v2088 = vand.u32 %v1313, 4294901760
    %v2089 = vsub.f32 %v1313, %v2088
    %v2090 = vand.u32 %v2089, 4294901760
    %2091 = vmatpush.msra.mxu0 %v2090
    %v2092 = vand.u32 %v1297, 4294901760
    %v2093 = vsub.f32 %v1297, %v2092
    %v2094 = vand.u32 %v2093, 4294901760
    %2095 = vmatpush.msra.mxu0 %v2094
    %v2096 = vand.u32 %v1281, 4294901760
    %v2097 = vsub.f32 %v1281, %v2096
    %v2098 = vand.u32 %v2097, 4294901760
    %2099 = vmatpush.msra.mxu0 %v2098
    %v2100 = vand.u32 %v1265, 4294901760
    %v2101 = vsub.f32 %v1265, %v2100
    %v2102 = vand.u32 %v2101, 4294901760
    %2103 = vmatpush.msra.mxu0 %v2102
    %v2104 = vand.u32 %v1387, 4294901760
    %2105 = vmatmul.f32.gmra.mxu0 %v2104
    %v2106 = vpop.f32.mrf.mxu0
    %v2107 = vadd.f32 %v2059, %v2106
    %2108 = vdwg.mxu0
    %2109 = vmatpush.msra.mxu0 0.0
    %2110 = vmatpush.msra.mxu0 0.0
    %2111 = vmatpush.msra.mxu0 0.0
    %2112 = vmatpush.msra.mxu0 0.0
    %2113 = vmatpush.msra.mxu0 0.0
    %2114 = vmatpush.msra.mxu0 0.0
    %2115 = vmatpush.msra.mxu0 0.0
    %v2116 = vand.u32 %v1377, 4294901760
    %2117 = vmatpush.msra.mxu0 %v2116
    %v2118 = vand.u32 %v1361, 4294901760
    %2119 = vmatpush.msra.mxu0 %v2118
    %v2120 = vand.u32 %v1345, 4294901760
    %2121 = vmatpush.msra.mxu0 %v2120
    %v2122 = vand.u32 %v1329, 4294901760
    %2123 = vmatpush.msra.mxu0 %v2122
    %v2124 = vand.u32 %v1249, 4294901760
    %2125 = vmatpush.msra.mxu0 %v2124
    %v2126 = vand.u32 %v1313, 4294901760
    %2127 = vmatpush.msra.mxu0 %v2126
    %v2128 = vand.u32 %v1297, 4294901760
    %2129 = vmatpush.msra.mxu0 %v2128
    %v2130 = vand.u32 %v1281, 4294901760
    %2131 = vmatpush.msra.mxu0 %v2130
    %v2132 = vand.u32 %v1265, 4294901760
    %2133 = vmatpush.msra.mxu0 %v2132
    %v2134 = vand.u32 %v1387, 4294901760
    %2135 = vmatmul.f32.gmra.mxu0 %v2134
    %v2136 = vpop.f32.mrf.mxu0
    %v2137 = vadd.f32 %v2107, %v2136
    %2138 = vdwg.mxu0
    %2139 = vmatpush.msra.mxu0 0.0
    %2140 = vmatpush.msra.mxu0 0.0
    %2141 = vmatpush.msra.mxu0 0.0
    %2142 = vmatpush.msra.mxu0 0.0
    %2143 = vmatpush.msra.mxu0 0.0
    %2144 = vmatpush.msra.mxu0 0.0
    %2145 = vmatpush.msra.mxu0 0.0
    %v2146 = vand.u32 %v1378, 4294901760
    %2147 = vmatpush.msra.mxu0 %v2146
    %v2148 = vand.u32 %v1362, 4294901760
    %2149 = vmatpush.msra.mxu0 %v2148
    %v2150 = vand.u32 %v1346, 4294901760
    %2151 = vmatpush.msra.mxu0 %v2150
    %v2152 = vand.u32 %v1330, 4294901760
    %2153 = vmatpush.msra.mxu0 %v2152
    %v2154 = vand.u32 %v1250, 4294901760
    %2155 = vmatpush.msra.mxu0 %v2154
    %v2156 = vand.u32 %v1314, 4294901760
    %2157 = vmatpush.msra.mxu0 %v2156
    %v2158 = vand.u32 %v1298, 4294901760
    %2159 = vmatpush.msra.mxu0 %v2158
    %v2160 = vand.u32 %v1282, 4294901760
    %2161 = vmatpush.msra.mxu0 %v2160
    %v2162 = vand.u32 %v1266, 4294901760
    %2163 = vmatpush.msra.mxu0 %v2162
    %v2164 = vand.u32 %v1387, 4294901760
    %v2165 = vsub.f32 %v1387, %v2164
    %v2166 = vand.u32 %v2165, 4294901760
    %v2167 = vsub.f32 %v2165, %v2166
    %v2168 = vand.u32 %v2167, 4294901760
    %2169 = vmatmul.f32.gmra.mxu0 %v2168
    %v2170 = vpop.f32.mrf.mxu0
    %v2171 = vadd.f32 %v1384, %v2170
    %2172 = vdwg.mxu0
    %2173 = vmatpush.msra.mxu0 0.0
    %2174 = vmatpush.msra.mxu0 0.0
    %2175 = vmatpush.msra.mxu0 0.0
    %2176 = vmatpush.msra.mxu0 0.0
    %2177 = vmatpush.msra.mxu0 0.0
    %2178 = vmatpush.msra.mxu0 0.0
    %2179 = vmatpush.msra.mxu0 0.0
    %v2180 = vand.u32 %v1378, 4294901760
    %v2181 = vsub.f32 %v1378, %v2180
    %v2182 = vand.u32 %v2181, 4294901760
    %v2183 = vsub.f32 %v2181, %v2182
    %v2184 = vand.u32 %v2183, 4294901760
    %2185 = vmatpush.msra.mxu0 %v2184
    %v2186 = vand.u32 %v1362, 4294901760
    %v2187 = vsub.f32 %v1362, %v2186
    %v2188 = vand.u32 %v2187, 4294901760
    %v2189 = vsub.f32 %v2187, %v2188
    %v2190 = vand.u32 %v2189, 4294901760
    %2191 = vmatpush.msra.mxu0 %v2190
    %v2192 = vand.u32 %v1346, 4294901760
    %v2193 = vsub.f32 %v1346, %v2192
    %v2194 = vand.u32 %v2193, 4294901760
    %v2195 = vsub.f32 %v2193, %v2194
    %v2196 = vand.u32 %v2195, 4294901760
    %2197 = vmatpush.msra.mxu0 %v2196
    %v2198 = vand.u32 %v1330, 4294901760
    %v2199 = vsub.f32 %v1330, %v2198
    %v2200 = vand.u32 %v2199, 4294901760
    %v2201 = vsub.f32 %v2199, %v2200
    %v2202 = vand.u32 %v2201, 4294901760
    %2203 = vmatpush.msra.mxu0 %v2202
    %v2204 = vand.u32 %v1250, 4294901760
    %v2205 = vsub.f32 %v1250, %v2204
    %v2206 = vand.u32 %v2205, 4294901760
    %v2207 = vsub.f32 %v2205, %v2206
    %v2208 = vand.u32 %v2207, 4294901760
    %2209 = vmatpush.msra.mxu0 %v2208
    %v2210 = vand.u32 %v1314, 4294901760
    %v2211 = vsub.f32 %v1314, %v2210
    %v2212 = vand.u32 %v2211, 4294901760
    %v2213 = vsub.f32 %v2211, %v2212
    %v2214 = vand.u32 %v2213, 4294901760
    %2215 = vmatpush.msra.mxu0 %v2214
    %v2216 = vand.u32 %v1298, 4294901760
    %v2217 = vsub.f32 %v1298, %v2216
    %v2218 = vand.u32 %v2217, 4294901760
    %v2219 = vsub.f32 %v2217, %v2218
    %v2220 = vand.u32 %v2219, 4294901760
    %2221 = vmatpush.msra.mxu0 %v2220
    %v2222 = vand.u32 %v1282, 4294901760
    %v2223 = vsub.f32 %v1282, %v2222
    %v2224 = vand.u32 %v2223, 4294901760
    %v2225 = vsub.f32 %v2223, %v2224
    %v2226 = vand.u32 %v2225, 4294901760
    %2227 = vmatpush.msra.mxu0 %v2226
    %v2228 = vand.u32 %v1266, 4294901760
    %v2229 = vsub.f32 %v1266, %v2228
    %v2230 = vand.u32 %v2229, 4294901760
    %v2231 = vsub.f32 %v2229, %v2230
    %v2232 = vand.u32 %v2231, 4294901760
    %2233 = vmatpush.msra.mxu0 %v2232
    %v2234 = vand.u32 %v1387, 4294901760
    %2235 = vmatmul.f32.gmra.mxu0 %v2234
    %v2236 = vpop.f32.mrf.mxu0
    %v2237 = vadd.f32 %v2171, %v2236
    %2238 = vdwg.mxu0
    %2239 = vmatpush.msra.mxu0 0.0
    %2240 = vmatpush.msra.mxu0 0.0
    %2241 = vmatpush.msra.mxu0 0.0
    %2242 = vmatpush.msra.mxu0 0.0
    %2243 = vmatpush.msra.mxu0 0.0
    %2244 = vmatpush.msra.mxu0 0.0
    %2245 = vmatpush.msra.mxu0 0.0
    %v2246 = vand.u32 %v1378, 4294901760
    %v2247 = vsub.f32 %v1378, %v2246
    %2248 = vmatpush.msra.mxu0 %v2247
    %v2249 = vand.u32 %v1362, 4294901760
    %v2250 = vsub.f32 %v1362, %v2249
    %2251 = vmatpush.msra.mxu0 %v2250
    %v2252 = vand.u32 %v1346, 4294901760
    %v2253 = vsub.f32 %v1346, %v2252
    %2254 = vmatpush.msra.mxu0 %v2253
    %v2255 = vand.u32 %v1330, 4294901760
    %v2256 = vsub.f32 %v1330, %v2255
    %2257 = vmatpush.msra.mxu0 %v2256
    %v2258 = vand.u32 %v1250, 4294901760
    %v2259 = vsub.f32 %v1250, %v2258
    %2260 = vmatpush.msra.mxu0 %v2259
    %v2261 = vand.u32 %v1314, 4294901760
    %v2262 = vsub.f32 %v1314, %v2261
    %2263 = vmatpush.msra.mxu0 %v2262
    %v2264 = vand.u32 %v1298, 4294901760
    %v2265 = vsub.f32 %v1298, %v2264
    %2266 = vmatpush.msra.mxu0 %v2265
    %v2267 = vand.u32 %v1282, 4294901760
    %v2268 = vsub.f32 %v1282, %v2267
    %2269 = vmatpush.msra.mxu0 %v2268
    %v2270 = vand.u32 %v1266, 4294901760
    %v2271 = vsub.f32 %v1266, %v2270
    %2272 = vmatpush.msra.mxu0 %v2271
    %v2273 = vand.u32 %v1387, 4294901760
    %v2274 = vsub.f32 %v1387, %v2273
    %2275 = vmatmul.f32.gmra.mxu0 %v2274
    %v2276 = vpop.f32.mrf.mxu0
    %v2277 = vadd.f32 %v2237, %v2276
    %2278 = vdwg.mxu0
    %2279 = vmatpush.msra.mxu0 0.0
    %2280 = vmatpush.msra.mxu0 0.0
    %2281 = vmatpush.msra.mxu0 0.0
    %2282 = vmatpush.msra.mxu0 0.0
    %2283 = vmatpush.msra.mxu0 0.0
    %2284 = vmatpush.msra.mxu0 0.0
    %2285 = vmatpush.msra.mxu0 0.0
    %v2286 = vand.u32 %v1378, 4294901760
    %2287 = vmatpush.msra.mxu0 %v2286
    %v2288 = vand.u32 %v1362, 4294901760
    %2289 = vmatpush.msra.mxu0 %v2288
    %v2290 = vand.u32 %v1346, 4294901760
    %2291 = vmatpush.msra.mxu0 %v2290
    %v2292 = vand.u32 %v1330, 4294901760
    %2293 = vmatpush.msra.mxu0 %v2292
    %v2294 = vand.u32 %v1250, 4294901760
    %2295 = vmatpush.msra.mxu0 %v2294
    %v2296 = vand.u32 %v1314, 4294901760
    %2297 = vmatpush.msra.mxu0 %v2296
    %v2298 = vand.u32 %v1298, 4294901760
    %2299 = vmatpush.msra.mxu0 %v2298
    %v2300 = vand.u32 %v1282, 4294901760
    %2301 = vmatpush.msra.mxu0 %v2300
    %v2302 = vand.u32 %v1266, 4294901760
    %2303 = vmatpush.msra.mxu0 %v2302
    %v2304 = vand.u32 %v1387, 4294901760
    %v2305 = vsub.f32 %v1387, %v2304
    %v2306 = vand.u32 %v2305, 4294901760
    %2307 = vmatmul.f32.gmra.mxu0 %v2306
    %v2308 = vpop.f32.mrf.mxu0
    %v2309 = vadd.f32 %v2277, %v2308
    %2310 = vdwg.mxu0
    %2311 = vmatpush.msra.mxu0 0.0
    %2312 = vmatpush.msra.mxu0 0.0
    %2313 = vmatpush.msra.mxu0 0.0
    %2314 = vmatpush.msra.mxu0 0.0
    %2315 = vmatpush.msra.mxu0 0.0
    %2316 = vmatpush.msra.mxu0 0.0
    %2317 = vmatpush.msra.mxu0 0.0
    %v2318 = vand.u32 %v1378, 4294901760
    %v2319 = vsub.f32 %v1378, %v2318
    %v2320 = vand.u32 %v2319, 4294901760
    %2321 = vmatpush.msra.mxu0 %v2320
    %v2322 = vand.u32 %v1362, 4294901760
    %v2323 = vsub.f32 %v1362, %v2322
    %v2324 = vand.u32 %v2323, 4294901760
    %2325 = vmatpush.msra.mxu0 %v2324
    %v2326 = vand.u32 %v1346, 4294901760
    %v2327 = vsub.f32 %v1346, %v2326
    %v2328 = vand.u32 %v2327, 4294901760
    %2329 = vmatpush.msra.mxu0 %v2328
    %v2330 = vand.u32 %v1330, 4294901760
    %v2331 = vsub.f32 %v1330, %v2330
    %v2332 = vand.u32 %v2331, 4294901760
    %2333 = vmatpush.msra.mxu0 %v2332
    %v2334 = vand.u32 %v1250, 4294901760
    %v2335 = vsub.f32 %v1250, %v2334
    %v2336 = vand.u32 %v2335, 4294901760
    %2337 = vmatpush.msra.mxu0 %v2336
    %v2338 = vand.u32 %v1314, 4294901760
    %v2339 = vsub.f32 %v1314, %v2338
    %v2340 = vand.u32 %v2339, 4294901760
    %2341 = vmatpush.msra.mxu0 %v2340
    %v2342 = vand.u32 %v1298, 4294901760
    %v2343 = vsub.f32 %v1298, %v2342
    %v2344 = vand.u32 %v2343, 4294901760
    %2345 = vmatpush.msra.mxu0 %v2344
    %v2346 = vand.u32 %v1282, 4294901760
    %v2347 = vsub.f32 %v1282, %v2346
    %v2348 = vand.u32 %v2347, 4294901760
    %2349 = vmatpush.msra.mxu0 %v2348
    %v2350 = vand.u32 %v1266, 4294901760
    %v2351 = vsub.f32 %v1266, %v2350
    %v2352 = vand.u32 %v2351, 4294901760
    %2353 = vmatpush.msra.mxu0 %v2352
    %v2354 = vand.u32 %v1387, 4294901760
    %2355 = vmatmul.f32.gmra.mxu0 %v2354
    %v2356 = vpop.f32.mrf.mxu0
    %v2357 = vadd.f32 %v2309, %v2356
    %2358 = vdwg.mxu0
    %2359 = vmatpush.msra.mxu0 0.0
    %2360 = vmatpush.msra.mxu0 0.0
    %2361 = vmatpush.msra.mxu0 0.0
    %2362 = vmatpush.msra.mxu0 0.0
    %2363 = vmatpush.msra.mxu0 0.0
    %2364 = vmatpush.msra.mxu0 0.0
    %2365 = vmatpush.msra.mxu0 0.0
    %v2366 = vand.u32 %v1378, 4294901760
    %2367 = vmatpush.msra.mxu0 %v2366
    %v2368 = vand.u32 %v1362, 4294901760
    %2369 = vmatpush.msra.mxu0 %v2368
    %v2370 = vand.u32 %v1346, 4294901760
    %2371 = vmatpush.msra.mxu0 %v2370
    %v2372 = vand.u32 %v1330, 4294901760
    %2373 = vmatpush.msra.mxu0 %v2372
    %v2374 = vand.u32 %v1250, 4294901760
    %2375 = vmatpush.msra.mxu0 %v2374
    %v2376 = vand.u32 %v1314, 4294901760
    %2377 = vmatpush.msra.mxu0 %v2376
    %v2378 = vand.u32 %v1298, 4294901760
    %2379 = vmatpush.msra.mxu0 %v2378
    %v2380 = vand.u32 %v1282, 4294901760
    %2381 = vmatpush.msra.mxu0 %v2380
    %v2382 = vand.u32 %v1266, 4294901760
    %2383 = vmatpush.msra.mxu0 %v2382
    %v2384 = vand.u32 %v1387, 4294901760
    %2385 = vmatmul.f32.gmra.mxu0 %v2384
    %v2386 = vpop.f32.mrf.mxu0
    %v2387 = vadd.f32 %v2357, %v2386
    %2388 = vdwg.mxu0
    %v2389 = vmax.f32 %v1637, 0.0
    %v2390 = vmax.f32 %v1887, 0.0
    %v2391 = vmax.f32 %v2137, 0.0
    %v2392 = vmax.f32 %v2387, 0.0
    %2393 = vst [vmem:[#allocation7] sm:$0xff] %v2389
    %2394 = vst [vmem:[#allocation7 + $0x8] sm:$0xff] %v2390
    %2395 = vst [vmem:[#allocation7 + $0x10] sm:$0xff] %v2391
    %2396 = vst [vmem:[#allocation7 + $0x18] sm:$0xff] %v2392
    // Predicated region
    $region34: #{tpu_custom_call.1} parent=1 // pred_check
      _
    $region35: #{tpu_custom_call.1} parent=1 // pred_check_branch
      %2398 = sbr.rel (0) target = $region37
    $region36: #{tpu_custom_call.1} parent=1 // pred_region
      %2400 = vsyncadd [#allocation4], 0
      %s2402 = sshll.u32 [#allocation7], 4
      %s2403 = int_to_ptr.vmem [resolvable:$true] %s2402
      %s2404 = sshll.u32 %s6, 4
      %s2405 = int_to_ptr.hbm [resolvable:$true] %s2404
      %2407 = dma.vmem_to_hbm [thread:$0]  %s2403, 512, %s2405, [#allocation4]
    $region37: #{tpu_custom_call.1} parent=1 // pred_fallthru
      _
    // Predicated region
    $region38: #{tpu_custom_call.1} parent=1 // pred_check
      _
    $region39: #{tpu_custom_call.1} parent=1 // pred_check_branch
      %2409 = sbr.rel (0) target = $region41
    $region40: #{tpu_custom_call.1} parent=1 // pred_region
      %2411 = dma.done [#allocation4], 512
    $region41: #{tpu_custom_call.1} parent=1 // pred_fallthru
      _
    %2412 = vsyncpa [#allocation3], 1
    %2413 = vsyncpa [#allocation6], 1
    %2414 = vsyncpa [#allocation4], 1

</llo_original>
